<compile_context>
chip_gen: v6e
topology: v6e:2x2x1
jax: 0.10.0
libtpu: 0.0.40
codegen_flags: <defaults>
</compile_context>

<pallas_src>
import functools

import numpy as np
import jax
import jax.numpy as jnp
from jax.experimental import pallas as pl
from jax.experimental.pallas import tpu as pltpu

TARGET_DIM = 7          # absT_quaR: 3 (t) + 4 (quaternion)
TIME_DIM   = 32         # sinusoidal timestep embedding
HIDDEN_DIM = 256        # denoiser MLP hidden width
COND_DIM   = 768        # class-token feature dim (fixed by the reference forward)
NUM_STEPS  = 8          # diffusion sampling steps (small, synthetic)
PAD_B      = 8          # sublane padding of the batch axis (fp32 sublane = 8)
LANES      = 128        # lane-dense padding of the 7-wide pose / 39-wide [x_t|t_emb] input


# --------------------------------------------------------------------------- fused Pallas kernel

def _build_sampler_kernel(coef1, coef2, use_cond):
    """Builds the fused sampler kernel with the DDPM schedule baked in as constants.

    coef1/coef2 : length-NUM_STEPS Python floats (posterior-mean coefficients)
    use_cond    : length-NUM_STEPS Python bools  (conditioning gate per step)
    """

    def kernel(cond_ref, xinit_ref, temb_ref, noise_ref,
               w1xt_ref, w1c_ref, b1_ref, w2_ref, b2_ref, out_ref):
        # cond  : [PAD_B, 768] f32   mean(class_token), rows >= B are zero
        # xinit : [PAD_B, 128] f32   x_T in lanes 0:7
        # temb  : [NUM_STEPS*PAD_B, 128] f32   per-step t_emb in lanes 7:39
        # noise : [NUM_STEPS*PAD_B, 128] f32   sigma * noise in lanes 0:7 (sigma pre-folded)
        # w1xt  : [128, 256] bf16,  w1c: [768, 256] bf16,  w2: [256, 128] bf16
        # b1    : [PAD_B, 256] f32,  b2: [PAD_B, 128] f32
        # out   : [NUM_STEPS*PAD_B, 128] f32  (per-step samples, lane-dense stores)

        # Step-invariant conditioning contraction, computed exactly once.
        hc = jnp.dot(cond_ref[...].astype(jnp.bfloat16), w1c_ref[...],
                     preferred_element_type=jnp.float32)              # [PAD_B, 256]

        w1xt = w1xt_ref[...]
        w2 = w2_ref[...]
        b1 = b1_ref[...]
        b2 = b2_ref[...]
        x_t = xinit_ref[...]                                          # [PAD_B, 128]

        for s in range(NUM_STEPS):                                    # fully unrolled
            lo = s * PAD_B
            # lanes 0:7 = x_t, lanes 7:39 = t_emb (disjoint) -> add replaces concat
            x_in = x_t + temb_ref[lo:lo + PAD_B, :]
            h = jnp.dot(x_in.astype(jnp.bfloat16), w1xt,
                        preferred_element_type=jnp.float32)           # [PAD_B, 256]
            if use_cond[s]:
                h = h + hc
            h = jnp.maximum(h + b1, 0.0)
            x0 = jnp.dot(h.astype(jnp.bfloat16), w2,
                         preferred_element_type=jnp.float32) + b2     # [PAD_B, 128]
            x_t = coef1[s] * x0 + coef2[s] * x_t + noise_ref[lo:lo + PAD_B, :]
            out_ref[lo:lo + PAD_B, :] = x_t

    return kernel


# --------------------------------------------------------------------------- static (numpy) tables

def _ddpm_schedule_np():
    betas = np.linspace(1e-4, 0.02, NUM_STEPS, dtype=np.float64)
    alphas = 1.0 - betas
    a_cum = np.cumprod(alphas)
    a_cum_prev = np.concatenate([np.ones((1,)), a_cum[:-1]])
    post_var = betas * (1.0 - a_cum_prev) / (1.0 - a_cum)
    coef1 = betas * np.sqrt(a_cum_prev) / (1.0 - a_cum)
    coef2 = (1.0 - a_cum_prev) * np.sqrt(alphas) / (1.0 - a_cum)
    ts = np.arange(NUM_STEPS - 1, -1, -1)                    # timestep t per sampling step
    sig = (ts > 0).astype(np.float64) * np.sqrt(post_var[ts])
    return (coef1[ts].astype(np.float32), coef2[ts].astype(np.float32),
            sig.astype(np.float32), ts)


def _timestep_embedding_np(t, dim):
    half = dim // 2
    freqs = np.exp(-np.log(10000.0) * np.arange(half, dtype=np.float32) / half)
    args = t[:, None].astype(np.float32) * freqs[None, :]
    return np.concatenate([np.sin(args), np.cos(args)], axis=-1).astype(np.float32)


# --------------------------------------------------------------------------- params & glue

def init_denoiser_params(key):
    k1, k2 = jax.random.split(key)
    d_xt = TARGET_DIM + TIME_DIM
    d_in = d_xt + COND_DIM
    w1 = jax.random.normal(k1, (d_in, HIDDEN_DIM), jnp.float32) * 0.02
    w2 = jax.random.normal(k2, (HIDDEN_DIM, TARGET_DIM), jnp.float32) * 0.02
    w1xt = jnp.zeros((LANES, HIDDEN_DIM), jnp.float32).at[:d_xt].set(w1[:d_xt])
    w1c = w1[d_xt:]
    w2p = jnp.zeros((HIDDEN_DIM, LANES), jnp.float32).at[:, :TARGET_DIM].set(w2)
    return dict(
        w1xt=w1xt.astype(jnp.bfloat16),                        # [128, 256]
        w1c=w1c.astype(jnp.bfloat16),                          # [768, 256]
        b1=jnp.zeros((PAD_B, HIDDEN_DIM), jnp.float32),
        w2=w2p.astype(jnp.bfloat16),                           # [256, 128]
        b2=jnp.zeros((PAD_B, LANES), jnp.float32),
    )


@functools.partial(jax.jit, static_argnames=("B", "cond_start_step"))
def gaussian_diffusion_sample(params, class_token, B, key, cond_start_step=0):
    """Fused DDPM sampler (x0-prediction).

    Returns (final pose encoding [B,7], per-step samples [B, NUM_STEPS, 7])."""

    # --- static (trace-time) schedule / timestep-embedding / padding scaffolding ---
    coef1, coef2, sig, ts = _ddpm_schedule_np()
    use_cond = [bool(s >= cond_start_step) for s in range(NUM_STEPS)]

    t_emb = _timestep_embedding_np(ts, TIME_DIM)                               # [N, 32]
    temb_np = np.zeros((NUM_STEPS, PAD_B, LANES), np.float32)
    temb_np[:, :, TARGET_DIM:TARGET_DIM + TIME_DIM] = t_emb[:, None, :]
    temb_tab = jnp.asarray(temb_np.reshape(NUM_STEPS * PAD_B, LANES))

    noise_mask = np.zeros((NUM_STEPS, PAD_B, LANES), np.float32)               # sigma folded in
    noise_mask[:, :B, :TARGET_DIM] = sig[:, None, None]
    x_mask = np.zeros((PAD_B, LANES), np.float32)
    x_mask[:B, :TARGET_DIM] = 1.0

    # --- runtime randomness (only runtime table ops) ---
    k_init, k_noise = jax.random.split(key)
    x_init = jax.random.normal(k_init, (PAD_B, LANES), jnp.float32) * jnp.asarray(x_mask)
    noise_tab = (jax.random.normal(k_noise, (NUM_STEPS, PAD_B, LANES), jnp.float32)
                 * jnp.asarray(noise_mask)).reshape(NUM_STEPS * PAD_B, LANES)

    # --- conditioning: token pooling hoisted out of the kernel ---
    cond = jnp.mean(class_token.astype(jnp.float32), axis=1)                   # [B, 768]
    cond_pad = jnp.zeros((PAD_B, COND_DIM), jnp.float32).at[:B].set(cond)

    kernel = _build_sampler_kernel([float(c) for c in coef1],
                                   [float(c) for c in coef2],
                                   use_cond)
    full = lambda i: (0, 0)

    samples = pl.pallas_call(
        kernel,
        out_shape=jax.ShapeDtypeStruct((NUM_STEPS * PAD_B, LANES), jnp.float32),
        grid=(1,),
        in_specs=[
            pl.BlockSpec((PAD_B, COND_DIM), full),                  # pooled class tokens
            pl.BlockSpec((PAD_B, LANES), full),                     # x_T
            pl.BlockSpec((NUM_STEPS * PAD_B, LANES), full),         # t_emb table (resident)
            pl.BlockSpec((NUM_STEPS * PAD_B, LANES), full),         # sigma*noise table (resident)
            pl.BlockSpec((LANES, HIDDEN_DIM), full),                # W1_xt (bf16)
            pl.BlockSpec((COND_DIM, HIDDEN_DIM), full),             # W1_c  (bf16)
            pl.BlockSpec((PAD_B, HIDDEN_DIM), full),                # b1
            pl.BlockSpec((HIDDEN_DIM, LANES), full),                # W2 (bf16)
            pl.BlockSpec((PAD_B, LANES), full),                     # b2
        ],
        out_specs=pl.BlockSpec((NUM_STEPS * PAD_B, LANES), full),
        compiler_params=pltpu.CompilerParams(dimension_semantics=("arbitrary",)),
    )(cond_pad, x_init, temb_tab, noise_tab,
      params["w1xt"], params["w1c"], params["b1"], params["w2"], params["b2"])

    samples = samples.reshape(NUM_STEPS, PAD_B, LANES)[:, :B, :TARGET_DIM]     # [N, B, 7]
    x_final = samples[-1]                                                      # last sampling step
    return x_final, jnp.transpose(samples, (1, 0, 2))                          # [B, N, 7]


def quaternion_to_matrix(q):
    q = q / (jnp.linalg.norm(q, axis=-1, keepdims=True) + 1e-8)
    w, x, y, z = jnp.moveaxis(q, -1, 0)
    R = jnp.stack([
        1 - 2 * (y * y + z * z), 2 * (x * y - z * w), 2 * (x * z + y * w),
        2 * (x * y + z * w), 1 - 2 * (x * x + z * z), 2 * (y * z - x * w),
        2 * (x * z - y * w), 2 * (y * z + x * w), 1 - 2 * (x * x + y * y),
    ], axis=-1)
    return R.reshape(q.shape[:-1] + (3, 3))


def pose_encoding_to_Rt(enc, pose_encoding_type="absT_quaR"):
    assert pose_encoding_type == "absT_quaR"
    t = enc[..., :3]
    R = quaternion_to_matrix(enc[..., 3:7])
    return R, t


# --------------------------------------------------------------------------- the module

class PoseDiffusionModelPallas:
    def __init__(self, key):
        k1, k2, k3, k4 = jax.random.split(key, 4)
        self.pose_encoding_type = "absT_quaR"
        self.target_dim = TARGET_DIM
        self.denoiser_params = init_denoiser_params(k1)
        # constructed-but-unused-in-forward parameters (kept for structural parity):
        self.in_proj_w = jax.random.normal(k2, (TARGET_DIM, HIDDEN_DIM), jnp.float32) * 0.02
        self.out_proj_w = jax.random.normal(k3, (HIDDEN_DIM, TARGET_DIM), jnp.float32) * 0.02
        self.bg_token = jax.random.normal(k4, (1, 1, HIDDEN_DIM), jnp.float32) * 0.02

    def __call__(self, p1, f1, geo1, fps_idx1, p2, f2, geo2, fps_idx2, radius,
                 end_points, cond_start_step=0, *, key):
        B = p1.shape[0]
        img_class_token = end_points["img_class_token"].reshape(B, 1, 768)
        tem_class_token = end_points["tem_class_token"].reshape(B, -1, 768)
        class_token = jnp.concatenate([img_class_token, tem_class_token], axis=1)

        # All 8 diffusion steps (and the conditioning contraction) run inside ONE fused
        # Pallas kernel; only the token mean + random draws run as (jitted) XLA ops.
        pred_pose, pose_encoding_samples = gaussian_diffusion_sample(
            self.denoiser_params, class_token, B, key, cond_start_step)

        pred_R, pred_t = pose_encoding_to_Rt(pred_pose, self.pose_encoding_type)
        step_pred_R, step_pred_t = pose_encoding_to_Rt(pose_encoding_samples, self.pose_encoding_type)

        r = radius.reshape(-1, 1) + 1e-6
        end_points = dict(end_points)
        end_points["pred_R"] = pred_R
        end_points["pred_t"] = pred_t * r * 10.0
        end_points["pred_pose_score"] = jnp.ones((B,), jnp.float32)
        end_points["step_pred_R"] = step_pred_R
        end_points["step_pred_t"] = step_pred_t * (radius.reshape(-1, 1, 1) + 1e-6) * 10.0
        end_points["init_t"] = end_points["init_t"] * r
        return end_points


# --------------------------------------------------------------------------- demo

if __name__ == "__main__":
    key = jax.random.PRNGKey(0)
    kmodel, kdata, ksample = jax.random.split(key, 3)
    model = PoseDiffusionModelPallas(kmodel)

    B, N_pts, T_tem = 2, 16, 2
    ks = jax.random.split(kdata, 10)
    p1 = jax.random.normal(ks[0], (B, N_pts, 3))
    f1 = jax.random.normal(ks[1], (B, N_pts, 8))
    geo1 = jax.random.normal(ks[2], (B, N_pts, 8))
    fps_idx1 = jnp.zeros((B, N_pts), jnp.int32)
    p2 = jax.random.normal(ks[3], (B, N_pts, 3))
    f2 = jax.random.normal(ks[4], (B, N_pts, 8))
    geo2 = jax.random.normal(ks[5], (B, N_pts, 8))
    fps_idx2 = jnp.zeros((B, N_pts), jnp.int32)
    radius = jnp.abs(jax.random.normal(ks[6], (B,))) + 0.5

    end_points = {
        "init_R": jnp.tile(jnp.eye(3, dtype=jnp.float32)[None], (B, 1, 1)),
        "init_t": jax.random.normal(ks[7], (B, 3)),
        "img_class_token": jax.random.normal(ks[8], (B, 1, 768)),
        "tem_class_token": jax.random.normal(ks[9], (B, T_tem, 768)),
    }

    out = model(p1, f1, geo1, fps_idx1, p2, f2, geo2, fps_idx2, radius,
                end_points, cond_start_step=0, key=ksample)
    out = jax.tree_util.tree_map(jax.block_until_ready, out)

    assert out["pred_R"].shape == (B, 3, 3)
    assert out["pred_t"].shape == (B, 3)
    assert out["step_pred_R"].shape == (B, NUM_STEPS, 3, 3)
    assert out["step_pred_t"].shape == (B, NUM_STEPS, 3)
    assert out["pred_pose_score"].shape == (B,)
    assert bool(jnp.all(jnp.isfinite(out["pred_R"]))) and bool(jnp.all(jnp.isfinite(out["pred_t"])))
    print("KERNEL_OK")
</pallas_src>

<mosaic_0001>
module attributes {stable_mosaic.version = 11 : i64} {
  func.func @kernel(%arg0: i32, %arg1: memref<8x768xf32, #tpu.memory_space<vmem>>, %arg2: memref<8x128xf32, #tpu.memory_space<vmem>>, %arg3: memref<64x128xf32, #tpu.memory_space<vmem>>, %arg4: memref<64x128xf32, #tpu.memory_space<vmem>>, %arg5: memref<128x256xbf16, #tpu.memory_space<vmem>>, %arg6: memref<768x256xbf16, #tpu.memory_space<vmem>>, %arg7: memref<8x256xf32, #tpu.memory_space<vmem>>, %arg8: memref<256x128xbf16, #tpu.memory_space<vmem>>, %arg9: memref<8x128xf32, #tpu.memory_space<vmem>>, %arg10: memref<64x128xf32, #tpu.memory_space<vmem>>) attributes {dimension_semantics = [#tpu.dimension_semantics<arbitrary>], iteration_bounds = array<i64: 1>, scalar_prefetch = 0 : i64, scratch_operands = 0 : i64, tpu.core_type = #tpu.core_type<tc>, window_params = [{pipeline_mode = #tpu.pipeline_mode<synchronous>, transform_indices = @transform_0, window_bounds = array<i64: 8, 768>}, {pipeline_mode = #tpu.pipeline_mode<synchronous>, transform_indices = @transform_1, window_bounds = array<i64: 8, 128>}, {pipeline_mode = #tpu.pipeline_mode<synchronous>, transform_indices = @transform_2, window_bounds = array<i64: 64, 128>}, {pipeline_mode = #tpu.pipeline_mode<synchronous>, transform_indices = @transform_3, window_bounds = array<i64: 64, 128>}, {pipeline_mode = #tpu.pipeline_mode<synchronous>, transform_indices = @transform_4, window_bounds = array<i64: 128, 256>}, {pipeline_mode = #tpu.pipeline_mode<synchronous>, transform_indices = @transform_5, window_bounds = array<i64: 768, 256>}, {pipeline_mode = #tpu.pipeline_mode<synchronous>, transform_indices = @transform_6, window_bounds = array<i64: 8, 256>}, {pipeline_mode = #tpu.pipeline_mode<synchronous>, transform_indices = @transform_7, window_bounds = array<i64: 256, 128>}, {pipeline_mode = #tpu.pipeline_mode<synchronous>, transform_indices = @transform_8, window_bounds = array<i64: 8, 128>}, {pipeline_mode = #tpu.pipeline_mode<synchronous>, transform_indices = @transform_9, window_bounds = array<i64: 64, 128>}]} {
    %c0 = arith.constant 0 : index
    %c0_0 = arith.constant 0 : index
    %0 = vector.load %arg1[%c0, %c0_0] : memref<8x768xf32, #tpu.memory_space<vmem>>, vector<8x768xf32>
    %1 = arith.truncf %0 : vector<8x768xf32> to vector<8x768xbf16>
    %c0_1 = arith.constant 0 : index
    %c0_2 = arith.constant 0 : index
    %2 = vector.load %arg6[%c0_1, %c0_2] : memref<768x256xbf16, #tpu.memory_space<vmem>>, vector<768x256xbf16>
    %cst = arith.constant dense<0.000000e+00> : vector<8x256xf32>
    %3 = tpu.matmul %1, %2, %cst {dimension_numbers = #tpu.dot_dimension_numbers<[1], [0], [0], [1], [0, 0, 1, 1], [], []>} : vector<8x768xbf16>, vector<768x256xbf16>, vector<8x256xf32> -> vector<8x256xf32>
    %c0_3 = arith.constant 0 : index
    %c0_4 = arith.constant 0 : index
    %4 = vector.load %arg5[%c0_3, %c0_4] : memref<128x256xbf16, #tpu.memory_space<vmem>>, vector<128x256xbf16>
    %c0_5 = arith.constant 0 : index
    %c0_6 = arith.constant 0 : index
    %5 = vector.load %arg8[%c0_5, %c0_6] : memref<256x128xbf16, #tpu.memory_space<vmem>>, vector<256x128xbf16>
    %c0_7 = arith.constant 0 : index
    %c0_8 = arith.constant 0 : index
    %6 = vector.load %arg7[%c0_7, %c0_8] : memref<8x256xf32, #tpu.memory_space<vmem>>, vector<8x256xf32>
    %c0_9 = arith.constant 0 : index
    %c0_10 = arith.constant 0 : index
    %7 = vector.load %arg9[%c0_9, %c0_10] : memref<8x128xf32, #tpu.memory_space<vmem>>, vector<8x128xf32>
    %c0_11 = arith.constant 0 : index
    %c0_12 = arith.constant 0 : index
    %8 = vector.load %arg2[%c0_11, %c0_12] : memref<8x128xf32, #tpu.memory_space<vmem>>, vector<8x128xf32>
    %c0_13 = arith.constant 0 : index
    %c0_14 = arith.constant 0 : index
    %9 = vector.load %arg3[%c0_13, %c0_14] : memref<64x128xf32, #tpu.memory_space<vmem>>, vector<8x128xf32>
    %10 = arith.addf %8, %9 : vector<8x128xf32>
    %11 = arith.truncf %10 : vector<8x128xf32> to vector<8x128xbf16>
    %cst_15 = arith.constant dense<0.000000e+00> : vector<8x256xf32>
    %12 = tpu.matmul %11, %4, %cst_15 {dimension_numbers = #tpu.dot_dimension_numbers<[1], [0], [0], [1], [0, 0, 1, 1], [], []>} : vector<8x128xbf16>, vector<128x256xbf16>, vector<8x256xf32> -> vector<8x256xf32>
    %13 = arith.addf %12, %3 : vector<8x256xf32>
    %14 = arith.addf %13, %6 : vector<8x256xf32>
    %cst_16 = arith.constant 0.000000e+00 : f32
    %15 = vector.broadcast %cst_16 : f32 to vector<8x256xf32>
    %16 = arith.maximumf %14, %15 : vector<8x256xf32>
    %17 = arith.truncf %16 : vector<8x256xf32> to vector<8x256xbf16>
    %cst_17 = arith.constant dense<0.000000e+00> : vector<8x128xf32>
    %18 = tpu.matmul %17, %5, %cst_17 {dimension_numbers = #tpu.dot_dimension_numbers<[1], [0], [0], [1], [0, 0, 1, 1], [], []>} : vector<8x256xbf16>, vector<256x128xbf16>, vector<8x128xf32> -> vector<8x128xf32>
    %19 = arith.addf %18, %7 : vector<8x128xf32>
    %cst_18 = arith.constant 0.249414057 : f32
    %20 = vector.broadcast %cst_18 : f32 to vector<8x128xf32>
    %21 = arith.mulf %20, %19 : vector<8x128xf32>
    %cst_19 = arith.constant 0.750432491 : f32
    %22 = vector.broadcast %cst_19 : f32 to vector<8x128xf32>
    %23 = arith.mulf %22, %8 : vector<8x128xf32>
    %24 = arith.addf %21, %23 : vector<8x128xf32>
    %c0_20 = arith.constant 0 : index
    %c0_21 = arith.constant 0 : index
    %25 = vector.load %arg4[%c0_20, %c0_21] : memref<64x128xf32, #tpu.memory_space<vmem>>, vector<8x128xf32>
    %26 = arith.addf %24, %25 : vector<8x128xf32>
    %c0_22 = arith.constant 0 : index
    %c0_23 = arith.constant 0 : index
    %27 = vector.load %arg10[%c0_22, %c0_23] : memref<64x128xf32, #tpu.memory_space<vmem>>, vector<8x128xf32>
    tpu.vector_store %arg10[%c0_22, %c0_23], %26 {strides = array<i32>} : memref<64x128xf32, #tpu.memory_space<vmem>>, vector<8x128xf32>,
    %c8 = arith.constant 8 : index
    %c0_24 = arith.constant 0 : index
    %28 = vector.load %arg3[%c8, %c0_24] : memref<64x128xf32, #tpu.memory_space<vmem>>, vector<8x128xf32>
    %29 = arith.addf %26, %28 : vector<8x128xf32>
    %30 = arith.truncf %29 : vector<8x128xf32> to vector<8x128xbf16>
    %cst_25 = arith.constant dense<0.000000e+00> : vector<8x256xf32>
    %31 = tpu.matmul %30, %4, %cst_25 {dimension_numbers = #tpu.dot_dimension_numbers<[1], [0], [0], [1], [0, 0, 1, 1], [], []>} : vector<8x128xbf16>, vector<128x256xbf16>, vector<8x256xf32> -> vector<8x256xf32>
    %32 = arith.addf %31, %3 : vector<8x256xf32>
    %33 = arith.addf %32, %6 : vector<8x256xf32>
    %cst_26 = arith.constant 0.000000e+00 : f32
    %34 = vector.broadcast %cst_26 : f32 to vector<8x256xf32>
    %35 = arith.maximumf %33, %34 : vector<8x256xf32>
    %36 = arith.truncf %35 : vector<8x256xf32> to vector<8x256xbf16>
    %cst_27 = arith.constant dense<0.000000e+00> : vector<8x128xf32>
    %37 = tpu.matmul %36, %5, %cst_27 {dimension_numbers = #tpu.dot_dimension_numbers<[1], [0], [0], [1], [0, 0, 1, 1], [], []>} : vector<8x256xbf16>, vector<256x128xbf16>, vector<8x128xf32> -> vector<8x128xf32>
    %38 = arith.addf %37, %7 : vector<8x128xf32>
    %cst_28 = arith.constant 0.284705102 : f32
    %39 = vector.broadcast %cst_28 : f32 to vector<8x128xf32>
    %40 = arith.mulf %39, %38 : vector<8x128xf32>
    %cst_29 = arith.constant 0.715200841 : f32
    %41 = vector.broadcast %cst_29 : f32 to vector<8x128xf32>
    %42 = arith.mulf %41, %26 : vector<8x128xf32>
    %43 = arith.addf %40, %42 : vector<8x128xf32>
    %c8_30 = arith.constant 8 : index
    %c0_31 = arith.constant 0 : index
    %44 = vector.load %arg4[%c8_30, %c0_31] : memref<64x128xf32, #tpu.memory_space<vmem>>, vector<8x128xf32>
    %45 = arith.addf %43, %44 : vector<8x128xf32>
    %c8_32 = arith.constant 8 : index
    %c0_33 = arith.constant 0 : index
    %46 = vector.load %arg10[%c8_32, %c0_33] : memref<64x128xf32, #tpu.memory_space<vmem>>, vector<8x128xf32>
    tpu.vector_store %arg10[%c8_32, %c0_33], %45 {strides = array<i32>} : memref<64x128xf32, #tpu.memory_space<vmem>>, vector<8x128xf32>,
    %c16 = arith.constant 16 : index
    %c0_34 = arith.constant 0 : index
    %47 = vector.load %arg3[%c16, %c0_34] : memref<64x128xf32, #tpu.memory_space<vmem>>, vector<8x128xf32>
    %48 = arith.addf %45, %47 : vector<8x128xf32>
    %49 = arith.truncf %48 : vector<8x128xf32> to vector<8x128xbf16>
    %cst_35 = arith.constant dense<0.000000e+00> : vector<8x256xf32>
    %50 = tpu.matmul %49, %4, %cst_35 {dimension_numbers = #tpu.dot_dimension_numbers<[1], [0], [0], [1], [0, 0, 1, 1], [], []>} : vector<8x128xbf16>, vector<128x256xbf16>, vector<8x256xf32> -> vector<8x256xf32>
    %51 = arith.addf %50, %3 : vector<8x256xf32>
    %52 = arith.addf %51, %6 : vector<8x256xf32>
    %cst_36 = arith.constant 0.000000e+00 : f32
    %53 = vector.broadcast %cst_36 : f32 to vector<8x256xf32>
    %54 = arith.maximumf %52, %53 : vector<8x256xf32>
    %55 = arith.truncf %54 : vector<8x256xf32> to vector<8x256xbf16>
    %cst_37 = arith.constant dense<0.000000e+00> : vector<8x128xf32>
    %56 = tpu.matmul %55, %5, %cst_37 {dimension_numbers = #tpu.dot_dimension_numbers<[1], [0], [0], [1], [0, 0, 1, 1], [], []>} : vector<8x256xbf16>, vector<256x128xbf16>, vector<8x128xf32> -> vector<8x128xf32>
    %57 = arith.addf %56, %7 : vector<8x128xf32>
    %cst_38 = arith.constant 0.331638366 : f32
    %58 = vector.broadcast %cst_38 : f32 to vector<8x128xf32>
    %59 = arith.mulf %58, %57 : vector<8x128xf32>
    %cst_39 = arith.constant 0.668309271 : f32
    %60 = vector.broadcast %cst_39 : f32 to vector<8x128xf32>
    %61 = arith.mulf %60, %45 : vector<8x128xf32>
    %62 = arith.addf %59, %61 : vector<8x128xf32>
    %c16_40 = arith.constant 16 : index
    %c0_41 = arith.constant 0 : index
    %63 = vector.load %arg4[%c16_40, %c0_41] : memref<64x128xf32, #tpu.memory_space<vmem>>, vector<8x128xf32>
    %64 = arith.addf %62, %63 : vector<8x128xf32>
    %c16_42 = arith.constant 16 : index
    %c0_43 = arith.constant 0 : index
    %65 = vector.load %arg10[%c16_42, %c0_43] : memref<64x128xf32, #tpu.memory_space<vmem>>, vector<8x128xf32>
    tpu.vector_store %arg10[%c16_42, %c0_43], %64 {strides = array<i32>} : memref<64x128xf32, #tpu.memory_space<vmem>>, vector<8x128xf32>,
    %c24 = arith.constant 24 : index
    %c0_44 = arith.constant 0 : index
    %66 = vector.load %arg3[%c24, %c0_44] : memref<64x128xf32, #tpu.memory_space<vmem>>, vector<8x128xf32>
    %67 = arith.addf %64, %66 : vector<8x128xf32>
    %68 = arith.truncf %67 : vector<8x128xf32> to vector<8x128xbf16>
    %cst_45 = arith.constant dense<0.000000e+00> : vector<8x256xf32>
    %69 = tpu.matmul %68, %4, %cst_45 {dimension_numbers = #tpu.dot_dimension_numbers<[1], [0], [0], [1], [0, 0, 1, 1], [], []>} : vector<8x128xbf16>, vector<128x256xbf16>, vector<8x256xf32> -> vector<8x256xf32>
    %70 = arith.addf %69, %3 : vector<8x256xf32>
    %71 = arith.addf %70, %6 : vector<8x256xf32>
    %cst_46 = arith.constant 0.000000e+00 : f32
    %72 = vector.broadcast %cst_46 : f32 to vector<8x256xf32>
    %73 = arith.maximumf %71, %72 : vector<8x256xf32>
    %74 = arith.truncf %73 : vector<8x256xf32> to vector<8x256xbf16>
    %cst_47 = arith.constant dense<0.000000e+00> : vector<8x128xf32>
    %75 = tpu.matmul %74, %5, %cst_47 {dimension_numbers = #tpu.dot_dimension_numbers<[1], [0], [0], [1], [0, 0, 1, 1], [], []>} : vector<8x256xbf16>, vector<256x128xbf16>, vector<8x128xf32> -> vector<8x128xf32>
    %76 = arith.addf %75, %7 : vector<8x128xf32>
    %cst_48 = arith.constant 0.397108972 : f32
    %77 = vector.broadcast %cst_48 : f32 to vector<8x128xf32>
    %78 = arith.mulf %77, %76 : vector<8x128xf32>
    %cst_49 = arith.constant 0.602865756 : f32
    %79 = vector.broadcast %cst_49 : f32 to vector<8x128xf32>
    %80 = arith.mulf %79, %64 : vector<8x128xf32>
    %81 = arith.addf %78, %80 : vector<8x128xf32>
    %c24_50 = arith.constant 24 : index
    %c0_51 = arith.constant 0 : index
    %82 = vector.load %arg4[%c24_50, %c0_51] : memref<64x128xf32, #tpu.memory_space<vmem>>, vector<8x128xf32>
    %83 = arith.addf %81, %82 : vector<8x128xf32>
    %c24_52 = arith.constant 24 : index
    %c0_53 = arith.constant 0 : index
    %84 = vector.load %arg10[%c24_52, %c0_53] : memref<64x128xf32, #tpu.memory_space<vmem>>, vector<8x128xf32>
    tpu.vector_store %arg10[%c24_52, %c0_53], %83 {strides = array<i32>} : memref<64x128xf32, #tpu.memory_space<vmem>>, vector<8x128xf32>,
    %c32 = arith.constant 32 : index
    %c0_54 = arith.constant 0 : index
    %85 = vector.load %arg3[%c32, %c0_54] : memref<64x128xf32, #tpu.memory_space<vmem>>, vector<8x128xf32>
    %86 = arith.addf %83, %85 : vector<8x128xf32>
    %87 = arith.truncf %86 : vector<8x128xf32> to vector<8x128xbf16>
    %cst_55 = arith.constant dense<0.000000e+00> : vector<8x256xf32>
    %88 = tpu.matmul %87, %4, %cst_55 {dimension_numbers = #tpu.dot_dimension_numbers<[1], [0], [0], [1], [0, 0, 1, 1], [], []>} : vector<8x128xbf16>, vector<128x256xbf16>, vector<8x256xf32> -> vector<8x256xf32>
    %89 = arith.addf %88, %3 : vector<8x256xf32>
    %90 = arith.addf %89, %6 : vector<8x256xf32>
    %cst_56 = arith.constant 0.000000e+00 : f32
    %91 = vector.broadcast %cst_56 : f32 to vector<8x256xf32>
    %92 = arith.maximumf %90, %91 : vector<8x256xf32>
    %93 = arith.truncf %92 : vector<8x256xf32> to vector<8x256xbf16>
    %cst_57 = arith.constant dense<0.000000e+00> : vector<8x128xf32>
    %94 = tpu.matmul %93, %5, %cst_57 {dimension_numbers = #tpu.dot_dimension_numbers<[1], [0], [0], [1], [0, 0, 1, 1], [], []>} : vector<8x256xbf16>, vector<256x128xbf16>, vector<8x128xf32> -> vector<8x128xf32>
    %95 = arith.addf %94, %7 : vector<8x128xf32>
    %cst_58 = arith.constant 0.494751245 : f32
    %96 = vector.broadcast %cst_58 : f32 to vector<8x128xf32>
    %97 = arith.mulf %96, %95 : vector<8x128xf32>
    %cst_59 = arith.constant 0.505239189 : f32
    %98 = vector.broadcast %cst_59 : f32 to vector<8x128xf32>
    %99 = arith.mulf %98, %83 : vector<8x128xf32>
    %100 = arith.addf %97, %99 : vector<8x128xf32>
    %c32_60 = arith.constant 32 : index
    %c0_61 = arith.constant 0 : index
    %101 = vector.load %arg4[%c32_60, %c0_61] : memref<64x128xf32, #tpu.memory_space<vmem>>, vector<8x128xf32>
    %102 = arith.addf %100, %101 : vector<8x128xf32>
    %c32_62 = arith.constant 32 : index
    %c0_63 = arith.constant 0 : index
    %103 = vector.load %arg10[%c32_62, %c0_63] : memref<64x128xf32, #tpu.memory_space<vmem>>, vector<8x128xf32>
    tpu.vector_store %arg10[%c32_62, %c0_63], %102 {strides = array<i32>} : memref<64x128xf32, #tpu.memory_space<vmem>>, vector<8x128xf32>,
    %c40 = arith.constant 40 : index
    %c0_64 = arith.constant 0 : index
    %104 = vector.load %arg3[%c40, %c0_64] : memref<64x128xf32, #tpu.memory_space<vmem>>, vector<8x128xf32>
    %105 = arith.addf %102, %104 : vector<8x128xf32>
    %106 = arith.truncf %105 : vector<8x128xf32> to vector<8x128xbf16>
    %cst_65 = arith.constant dense<0.000000e+00> : vector<8x256xf32>
    %107 = tpu.matmul %106, %4, %cst_65 {dimension_numbers = #tpu.dot_dimension_numbers<[1], [0], [0], [1], [0, 0, 1, 1], [], []>} : vector<8x128xbf16>, vector<128x256xbf16>, vector<8x256xf32> -> vector<8x256xf32>
    %108 = arith.addf %107, %3 : vector<8x256xf32>
    %109 = arith.addf %108, %6 : vector<8x256xf32>
    %cst_66 = arith.constant 0.000000e+00 : f32
    %110 = vector.broadcast %cst_66 : f32 to vector<8x256xf32>
    %111 = arith.maximumf %109, %110 : vector<8x256xf32>
    %112 = arith.truncf %111 : vector<8x256xf32> to vector<8x256xbf16>
    %cst_67 = arith.constant dense<0.000000e+00> : vector<8x128xf32>
    %113 = tpu.matmul %112, %5, %cst_67 {dimension_numbers = #tpu.dot_dimension_numbers<[1], [0], [0], [1], [0, 0, 1, 1], [], []>} : vector<8x256xbf16>, vector<256x128xbf16>, vector<8x128xf32> -> vector<8x128xf32>
    %114 = arith.addf %113, %7 : vector<8x128xf32>
    %cst_68 = arith.constant 0.655671298 : f32
    %115 = vector.broadcast %cst_68 : f32 to vector<8x128xf32>
    %116 = arith.mulf %115, %114 : vector<8x128xf32>
    %cst_69 = arith.constant 0.344326496 : f32
    %117 = vector.broadcast %cst_69 : f32 to vector<8x128xf32>
    %118 = arith.mulf %117, %102 : vector<8x128xf32>
    %119 = arith.addf %116, %118 : vector<8x128xf32>
    %c40_70 = arith.constant 40 : index
    %c0_71 = arith.constant 0 : index
    %120 = vector.load %arg4[%c40_70, %c0_71] : memref<64x128xf32, #tpu.memory_space<vmem>>, vector<8x128xf32>
    %121 = arith.addf %119, %120 : vector<8x128xf32>
    %c40_72 = arith.constant 40 : index
    %c0_73 = arith.constant 0 : index
    %122 = vector.load %arg10[%c40_72, %c0_73] : memref<64x128xf32, #tpu.memory_space<vmem>>, vector<8x128xf32>
    tpu.vector_store %arg10[%c40_72, %c0_73], %121 {strides = array<i32>} : memref<64x128xf32, #tpu.memory_space<vmem>>, vector<8x128xf32>,
    %c48 = arith.constant 48 : index
    %c0_74 = arith.constant 0 : index
    %123 = vector.load %arg3[%c48, %c0_74] : memref<64x128xf32, #tpu.memory_space<vmem>>, vector<8x128xf32>
    %124 = arith.addf %121, %123 : vector<8x128xf32>
    %125 = arith.truncf %124 : vector<8x128xf32> to vector<8x128xbf16>
    %cst_75 = arith.constant dense<0.000000e+00> : vector<8x256xf32>
    %126 = tpu.matmul %125, %4, %cst_75 {dimension_numbers = #tpu.dot_dimension_numbers<[1], [0], [0], [1], [0, 0, 1, 1], [], []>} : vector<8x128xbf16>, vector<128x256xbf16>, vector<8x256xf32> -> vector<8x256xf32>
    %127 = arith.addf %126, %3 : vector<8x256xf32>
    %128 = arith.addf %127, %6 : vector<8x256xf32>
    %cst_76 = arith.constant 0.000000e+00 : f32
    %129 = vector.broadcast %cst_76 : f32 to vector<8x256xf32>
    %130 = arith.maximumf %128, %129 : vector<8x256xf32>
    %131 = arith.truncf %130 : vector<8x256xf32> to vector<8x256xbf16>
    %cst_77 = arith.constant dense<0.000000e+00> : vector<8x128xf32>
    %132 = tpu.matmul %131, %5, %cst_77 {dimension_numbers = #tpu.dot_dimension_numbers<[1], [0], [0], [1], [0, 0, 1, 1], [], []>} : vector<8x256xbf16>, vector<256x128xbf16>, vector<8x128xf32> -> vector<8x128xf32>
    %133 = arith.addf %132, %7 : vector<8x128xf32>
    %cst_78 = arith.constant 0.967181324 : f32
    %134 = vector.broadcast %cst_78 : f32 to vector<8x128xf32>
    %135 = arith.mulf %134, %133 : vector<8x128xf32>
    %cst_79 = arith.constant 0.0328186303 : f32
    %136 = vector.broadcast %cst_79 : f32 to vector<8x128xf32>
    %137 = arith.mulf %136, %121 : vector<8x128xf32>
    %138 = arith.addf %135, %137 : vector<8x128xf32>
    %c48_80 = arith.constant 48 : index
    %c0_81 = arith.constant 0 : index
    %139 = vector.load %arg4[%c48_80, %c0_81] : memref<64x128xf32, #tpu.memory_space<vmem>>, vector<8x128xf32>
    %140 = arith.addf %138, %139 : vector<8x128xf32>
    %c48_82 = arith.constant 48 : index
    %c0_83 = arith.constant 0 : index
    %141 = vector.load %arg10[%c48_82, %c0_83] : memref<64x128xf32, #tpu.memory_space<vmem>>, vector<8x128xf32>
    tpu.vector_store %arg10[%c48_82, %c0_83], %140 {strides = array<i32>} : memref<64x128xf32, #tpu.memory_space<vmem>>, vector<8x128xf32>,
    %c56 = arith.constant 56 : index
    %c0_84 = arith.constant 0 : index
    %142 = vector.load %arg3[%c56, %c0_84] : memref<64x128xf32, #tpu.memory_space<vmem>>, vector<8x128xf32>
    %143 = arith.addf %140, %142 : vector<8x128xf32>
    %144 = arith.truncf %143 : vector<8x128xf32> to vector<8x128xbf16>
    %cst_85 = arith.constant dense<0.000000e+00> : vector<8x256xf32>
    %145 = tpu.matmul %144, %4, %cst_85 {dimension_numbers = #tpu.dot_dimension_numbers<[1], [0], [0], [1], [0, 0, 1, 1], [], []>} : vector<8x128xbf16>, vector<128x256xbf16>, vector<8x256xf32> -> vector<8x256xf32>
    %146 = arith.addf %145, %3 : vector<8x256xf32>
    %147 = arith.addf %146, %6 : vector<8x256xf32>
    %cst_86 = arith.constant 0.000000e+00 : f32
    %148 = vector.broadcast %cst_86 : f32 to vector<8x256xf32>
    %149 = arith.maximumf %147, %148 : vector<8x256xf32>
    %150 = arith.truncf %149 : vector<8x256xf32> to vector<8x256xbf16>
    %cst_87 = arith.constant dense<0.000000e+00> : vector<8x128xf32>
    %151 = tpu.matmul %150, %5, %cst_87 {dimension_numbers = #tpu.dot_dimension_numbers<[1], [0], [0], [1], [0, 0, 1, 1], [], []>} : vector<8x256xbf16>, vector<256x128xbf16>, vector<8x128xf32> -> vector<8x128xf32>
    %152 = arith.addf %151, %7 : vector<8x128xf32>
    %cst_88 = arith.constant 1.000000e+00 : f32
    %153 = vector.broadcast %cst_88 : f32 to vector<8x128xf32>
    %154 = arith.mulf %153, %152 : vector<8x128xf32>
    %cst_89 = arith.constant 0.000000e+00 : f32
    %155 = vector.broadcast %cst_89 : f32 to vector<8x128xf32>
    %156 = arith.mulf %155, %140 : vector<8x128xf32>
    %157 = arith.addf %154, %156 : vector<8x128xf32>
    %c56_90 = arith.constant 56 : index
    %c0_91 = arith.constant 0 : index
    %158 = vector.load %arg4[%c56_90, %c0_91] : memref<64x128xf32, #tpu.memory_space<vmem>>, vector<8x128xf32>
    %159 = arith.addf %157, %158 : vector<8x128xf32>
    %c56_92 = arith.constant 56 : index
    %c0_93 = arith.constant 0 : index
    %160 = vector.load %arg10[%c56_92, %c0_93] : memref<64x128xf32, #tpu.memory_space<vmem>>, vector<8x128xf32>
    tpu.vector_store %arg10[%c56_92, %c0_93], %159 {strides = array<i32>} : memref<64x128xf32, #tpu.memory_space<vmem>>, vector<8x128xf32>,
    return
  }
  func.func @transform_0(%arg0: i32) -> (i32, i32) {
    %c0_i32 = arith.constant 0 : i32
    %c0_i32_0 = arith.constant 0 : i32
    %c0_i32_1 = arith.constant 0 : i32
    return %c0_i32, %c0_i32_0 : i32, i32
  }
  func.func @transform_1(%arg0: i32) -> (i32, i32) {
    %c0_i32 = arith.constant 0 : i32
    %c0_i32_0 = arith.constant 0 : i32
    %c0_i32_1 = arith.constant 0 : i32
    return %c0_i32, %c0_i32_0 : i32, i32
  }
  func.func @transform_2(%arg0: i32) -> (i32, i32) {
    %c0_i32 = arith.constant 0 : i32
    %c0_i32_0 = arith.constant 0 : i32
    %c0_i32_1 = arith.constant 0 : i32
    return %c0_i32, %c0_i32_0 : i32, i32
  }
  func.func @transform_3(%arg0: i32) -> (i32, i32) {
    %c0_i32 = arith.constant 0 : i32
    %c0_i32_0 = arith.constant 0 : i32
    %c0_i32_1 = arith.constant 0 : i32
    return %c0_i32, %c0_i32_0 : i32, i32
  }
  func.func @transform_4(%arg0: i32) -> (i32, i32) {
    %c0_i32 = arith.constant 0 : i32
    %c0_i32_0 = arith.constant 0 : i32
    %c0_i32_1 = arith.constant 0 : i32
    return %c0_i32, %c0_i32_0 : i32, i32
  }
  func.func @transform_5(%arg0: i32) -> (i32, i32) {
    %c0_i32 = arith.constant 0 : i32
    %c0_i32_0 = arith.constant 0 : i32
    %c0_i32_1 = arith.constant 0 : i32
    return %c0_i32, %c0_i32_0 : i32, i32
  }
  func.func @transform_6(%arg0: i32) -> (i32, i32) {
    %c0_i32 = arith.constant 0 : i32
    %c0_i32_0 = arith.constant 0 : i32
    %c0_i32_1 = arith.constant 0 : i32
    return %c0_i32, %c0_i32_0 : i32, i32
  }
  func.func @transform_7(%arg0: i32) -> (i32, i32) {
    %c0_i32 = arith.constant 0 : i32
    %c0_i32_0 = arith.constant 0 : i32
    %c0_i32_1 = arith.constant 0 : i32
    return %c0_i32, %c0_i32_0 : i32, i32
  }
  func.func @transform_8(%arg0: i32) -> (i32, i32) {
    %c0_i32 = arith.constant 0 : i32
    %c0_i32_0 = arith.constant 0 : i32
    %c0_i32_1 = arith.constant 0 : i32
    return %c0_i32, %c0_i32_0 : i32, i32
  }
  func.func @transform_9(%arg0: i32) -> (i32, i32) {
    %c0_i32 = arith.constant 0 : i32
    %c0_i32_0 = arith.constant 0 : i32
    %c0_i32_1 = arith.constant 0 : i32
    return %c0_i32, %c0_i32_0 : i32, i32
  }
}

</mosaic_0001>

<llo_original>
// kernel: gaussian_diffusion_sample.3
$region0: #{gaussian_diffusion_sample.3}
  #allocation0 [shape = 'u32[]', space=smem, size = 0x4, offset = 0x4, fixed_abs, tag = 'smem constant byte address 0x4 - core index']
  #allocation1 [shape = 'u32[144,128]{1,0:T(1,128)}', space=vmem, size = 0x12000, scoped, tag = 'internal scratch']
  %s0 = inlined_call_operand.vmem [shape: f32[8,768], index: 0, kind: input, shape index: {}]
  %s1 = inlined_call_operand.vmem [shape: f32[8,128], index: 1, kind: input, shape index: {}]
  %s2 = inlined_call_operand.vmem [shape: f32[64,128], index: 2, kind: input, shape index: {}]
  %s3 = inlined_call_operand.vmem [shape: f32[64,128], index: 3, kind: input, shape index: {}]
  %s4 = inlined_call_operand.vmem [shape: bf16[128,256], index: 4, kind: input, shape index: {}]
  %s5 = inlined_call_operand.hbm [shape: bf16[768,256], index: 5, kind: input, shape index: {}]
  %s6 = inlined_call_operand.vmem [shape: f32[8,256], index: 6, kind: input, shape index: {}]
  %s7 = inlined_call_operand.vmem [shape: bf16[256,128], index: 7, kind: input, shape index: {}]
  %s8 = inlined_call_operand.hbm [shape: f32[8,128], index: 8, kind: input, shape index: {}]
  %s9 = inlined_call_operand.vmem [shape: f32[64,128], index: 9, kind: output, shape index: {}]
  %s10 = sld [smem:[#allocation0]]
  $region54: #{gaussian_diffusion_sample.3} parent=0
    _
  %s12 = ssub.s32 1, %s10
  %s13 = scalar_select 0, %s12, %s10
  $region1: #{gaussian_diffusion_sample.3} parent=0
    #allocation2 [shape = 'u8[393216]{0}', space=vmem, size = 0x60000, scoped, tag = 'input window, operand 5, single buffered']
    #allocation3 [shape = 's32[1]{0}', space=sflag, size = 0x4, scoped, tag = 'scoped memory for gaussian_diffusion_sample.3']
    #allocation4 [shape = 'u8[4096]{0}', space=vmem, size = 0x1000, scoped, tag = 'input window, operand 8, single buffered']
    #allocation5 [shape = 's32[1]{0}', space=sflag, size = 0x4, scoped, tag = 'scoped memory for gaussian_diffusion_sample.3']
    %14 = vsyncpa [#allocation3], 0
    %15 = vsyncpa [#allocation5], 0
    // Predicated region
    $region2: #{gaussian_diffusion_sample.3} parent=1 // pred_check
      _
    $region3: #{gaussian_diffusion_sample.3} parent=1 // pred_check_branch
      %17 = sbr.rel (0) target = $region5
    $region4: #{gaussian_diffusion_sample.3} parent=1 // pred_region
      _
    $region5: #{gaussian_diffusion_sample.3} parent=1 // pred_fallthru
      _
    // Predicated region
    $region6: #{gaussian_diffusion_sample.3} parent=1 // pred_check
      _
    $region7: #{gaussian_diffusion_sample.3} parent=1 // pred_check_branch
      %19 = sbr.rel (0) target = $region9
    $region8: #{gaussian_diffusion_sample.3} parent=1 // pred_region
      _
    $region9: #{gaussian_diffusion_sample.3} parent=1 // pred_fallthru
      _
    // Predicated region
    $region10: #{gaussian_diffusion_sample.3} parent=1 // pred_check
      _
    $region11: #{gaussian_diffusion_sample.3} parent=1 // pred_check_branch
      %21 = sbr.rel (0) target = $region13
    $region12: #{gaussian_diffusion_sample.3} parent=1 // pred_region
      _
    $region13: #{gaussian_diffusion_sample.3} parent=1 // pred_fallthru
      _
    // Predicated region
    $region14: #{gaussian_diffusion_sample.3} parent=1 // pred_check
      _
    $region15: #{gaussian_diffusion_sample.3} parent=1 // pred_check_branch
      %23 = sbr.rel (0) target = $region17
    $region16: #{gaussian_diffusion_sample.3} parent=1 // pred_region
      _
    $region17: #{gaussian_diffusion_sample.3} parent=1 // pred_fallthru
      _
    // Predicated region
    $region18: #{gaussian_diffusion_sample.3} parent=1 // pred_check
      _
    $region19: #{gaussian_diffusion_sample.3} parent=1 // pred_check_branch
      %25 = sbr.rel (0) target = $region21
    $region20: #{gaussian_diffusion_sample.3} parent=1 // pred_region
      _
    $region21: #{gaussian_diffusion_sample.3} parent=1 // pred_fallthru
      _
    // Predicated region
    $region22: #{gaussian_diffusion_sample.3} parent=1 // pred_check
      _
    $region23: #{gaussian_diffusion_sample.3} parent=1 // pred_check_branch
      %27 = sbr.rel (0) target = $region25
    $region24: #{gaussian_diffusion_sample.3} parent=1 // pred_region
      %s29 = ssub.s32 12288, 12288
      %30 = vsyncadd [#allocation3], %s29
      %s31 = sshll.u32 [#allocation2], 4
      %s32 = int_to_ptr.vmem [resolvable:$true] %s31
      %37 = dma.hbm_to_vmem [thread:$0]  %s5, 12288, %s32, [#allocation3], 128, 128, 8
    $region25: #{gaussian_diffusion_sample.3} parent=1 // pred_fallthru
      _
    // Predicated region
    $region26: #{gaussian_diffusion_sample.3} parent=1 // pred_check
      _
    $region27: #{gaussian_diffusion_sample.3} parent=1 // pred_check_branch
      %39 = sbr.rel (0) target = $region29
    $region28: #{gaussian_diffusion_sample.3} parent=1 // pred_region
      _
    $region29: #{gaussian_diffusion_sample.3} parent=1 // pred_fallthru
      _
    // Predicated region
    $region30: #{gaussian_diffusion_sample.3} parent=1 // pred_check
      _
    $region31: #{gaussian_diffusion_sample.3} parent=1 // pred_check_branch
      %41 = sbr.rel (0) target = $region33
    $region32: #{gaussian_diffusion_sample.3} parent=1 // pred_region
      _
    $region33: #{gaussian_diffusion_sample.3} parent=1 // pred_fallthru
      _
    // Predicated region
    $region34: #{gaussian_diffusion_sample.3} parent=1 // pred_check
      _
    $region35: #{gaussian_diffusion_sample.3} parent=1 // pred_check_branch
      %43 = sbr.rel (0) target = $region37
    $region36: #{gaussian_diffusion_sample.3} parent=1 // pred_region
      %s45 = ssub.s32 128, 128
      %46 = vsyncadd [#allocation5], %s45
      %s48 = sshll.u32 [#allocation4], 4
      %s49 = int_to_ptr.vmem [resolvable:$true] %s48
      %51 = dma.hbm_to_vmem [thread:$0]  %s8, 128, %s49, [#allocation5]
    $region37: #{gaussian_diffusion_sample.3} parent=1 // pred_fallthru
      _
    // Predicated region
    $region38: #{gaussian_diffusion_sample.3} parent=1 // pred_check
      _
    $region39: #{gaussian_diffusion_sample.3} parent=1 // pred_check_branch
      %53 = sbr.rel (0) target = $region41
    $region40: #{gaussian_diffusion_sample.3} parent=1 // pred_region
      %54 = dma.done [#allocation3], 12288
    $region41: #{gaussian_diffusion_sample.3} parent=1 // pred_fallthru
      _
    // Predicated region
    $region42: #{gaussian_diffusion_sample.3} parent=1 // pred_check
      _
    $region43: #{gaussian_diffusion_sample.3} parent=1 // pred_check_branch
      %56 = sbr.rel (0) target = $region45
    $region44: #{gaussian_diffusion_sample.3} parent=1 // pred_region
      %57 = dma.done [#allocation5], 128
    $region45: #{gaussian_diffusion_sample.3} parent=1 // pred_fallthru
      _
    %v59 = vld [vmem:[%s0] sm:$0xff]
    %v60 = vld [vmem:[%s0 + $0x8] sm:$0xff]
    %v61 = vld [vmem:[%s0 + $0x10] sm:$0xff]
    %v62 = vld [vmem:[%s0 + $0x18] sm:$0xff]
    %v63 = vld [vmem:[%s0 + $0x20] sm:$0xff]
    %v64 = vld [vmem:[%s0 + $0x28] sm:$0xff]
    %v65 = vpack.c.bf16 %v59, %v59
    %v66 = vpack.c.bf16 %v60, %v60
    %v67 = vpack.c.bf16 %v61, %v61
    %v68 = vpack.c.bf16 %v62, %v62
    %v69 = vpack.c.bf16 %v63, %v63
    %v70 = vpack.c.bf16 %v64, %v64
    %v71 = vld [vmem:[#allocation2] sm:$0xff]
    %v72 = vld [vmem:[#allocation2 + $0x8] sm:$0xff]
    %v73 = vld [vmem:[#allocation2 + $0x10] sm:$0xff]
    %v74 = vld [vmem:[#allocation2 + $0x18] sm:$0xff]
    %v75 = vld [vmem:[#allocation2 + $0x20] sm:$0xff]
    %v76 = vld [vmem:[#allocation2 + $0x28] sm:$0xff]
    %v77 = vld [vmem:[#allocation2 + $0x30] sm:$0xff]
    %v78 = vld [vmem:[#allocation2 + $0x38] sm:$0xff]
    %v79 = vld [vmem:[#allocation2 + $0x40] sm:$0xff]
    %v80 = vld [vmem:[#allocation2 + $0x48] sm:$0xff]
    %v81 = vld [vmem:[#allocation2 + $0x50] sm:$0xff]
    %v82 = vld [vmem:[#allocation2 + $0x58] sm:$0xff]
    %v83 = vld [vmem:[#allocation2 + $0x60] sm:$0xff]
    %v84 = vld [vmem:[#allocation2 + $0x68] sm:$0xff]
    %v85 = vld [vmem:[#allocation2 + $0x70] sm:$0xff]
    %v86 = vld [vmem:[#allocation2 + $0x78] sm:$0xff]
    %v87 = vld [vmem:[#allocation2 + $0x80] sm:$0xff]
    %v88 = vld [vmem:[#allocation2 + $0x88] sm:$0xff]
    %v89 = vld [vmem:[#allocation2 + $0x90] sm:$0xff]
    %v90 = vld [vmem:[#allocation2 + $0x98] sm:$0xff]
    %v91 = vld [vmem:[#allocation2 + $0xa0] sm:$0xff]
    %v92 = vld [vmem:[#allocation2 + $0xa8] sm:$0xff]
    %v93 = vld [vmem:[#allocation2 + $0xb0] sm:$0xff]
    %v94 = vld [vmem:[#allocation2 + $0xb8] sm:$0xff]
    %v95 = vld [vmem:[#allocation2 + $0xc0] sm:$0xff]
    %v96 = vld [vmem:[#allocation2 + $0xc8] sm:$0xff]
    %v97 = vld [vmem:[#allocation2 + $0xd0] sm:$0xff]
    %v98 = vld [vmem:[#allocation2 + $0xd8] sm:$0xff]
    %v99 = vld [vmem:[#allocation2 + $0xe0] sm:$0xff]
    %v100 = vld [vmem:[#allocation2 + $0xe8] sm:$0xff]
    %v101 = vld [vmem:[#allocation2 + $0xf0] sm:$0xff]
    %v102 = vld [vmem:[#allocation2 + $0xf8] sm:$0xff]
    %v103 = vld [vmem:[#allocation2 + $0x100] sm:$0xff]
    %v104 = vld [vmem:[#allocation2 + $0x108] sm:$0xff]
    %v105 = vld [vmem:[#allocation2 + $0x110] sm:$0xff]
    %v106 = vld [vmem:[#allocation2 + $0x118] sm:$0xff]
    %v107 = vld [vmem:[#allocation2 + $0x120] sm:$0xff]
    %v108 = vld [vmem:[#allocation2 + $0x128] sm:$0xff]
    %v109 = vld [vmem:[#allocation2 + $0x130] sm:$0xff]
    %v110 = vld [vmem:[#allocation2 + $0x138] sm:$0xff]
    %v111 = vld [vmem:[#allocation2 + $0x140] sm:$0xff]
    %v112 = vld [vmem:[#allocation2 + $0x148] sm:$0xff]
    %v113 = vld [vmem:[#allocation2 + $0x150] sm:$0xff]
    %v114 = vld [vmem:[#allocation2 + $0x158] sm:$0xff]
    %v115 = vld [vmem:[#allocation2 + $0x160] sm:$0xff]
    %v116 = vld [vmem:[#allocation2 + $0x168] sm:$0xff]
    %v117 = vld [vmem:[#allocation2 + $0x170] sm:$0xff]
    %v118 = vld [vmem:[#allocation2 + $0x178] sm:$0xff]
    %v119 = vld [vmem:[#allocation2 + $0x180] sm:$0xff]
    %v120 = vld [vmem:[#allocation2 + $0x188] sm:$0xff]
    %v121 = vld [vmem:[#allocation2 + $0x190] sm:$0xff]
    %v122 = vld [vmem:[#allocation2 + $0x198] sm:$0xff]
    %v123 = vld [vmem:[#allocation2 + $0x1a0] sm:$0xff]
    %v124 = vld [vmem:[#allocation2 + $0x1a8] sm:$0xff]
    %v125 = vld [vmem:[#allocation2 + $0x1b0] sm:$0xff]
    %v126 = vld [vmem:[#allocation2 + $0x1b8] sm:$0xff]
    %v127 = vld [vmem:[#allocation2 + $0x1c0] sm:$0xff]
    %v128 = vld [vmem:[#allocation2 + $0x1c8] sm:$0xff]
    %v129 = vld [vmem:[#allocation2 + $0x1d0] sm:$0xff]
    %v130 = vld [vmem:[#allocation2 + $0x1d8] sm:$0xff]
    %v131 = vld [vmem:[#allocation2 + $0x1e0] sm:$0xff]
    %v132 = vld [vmem:[#allocation2 + $0x1e8] sm:$0xff]
    %v133 = vld [vmem:[#allocation2 + $0x1f0] sm:$0xff]
    %v134 = vld [vmem:[#allocation2 + $0x1f8] sm:$0xff]
    %v135 = vld [vmem:[#allocation2 + $0x200] sm:$0xff]
    %v136 = vld [vmem:[#allocation2 + $0x208] sm:$0xff]
    %v137 = vld [vmem:[#allocation2 + $0x210] sm:$0xff]
    %v138 = vld [vmem:[#allocation2 + $0x218] sm:$0xff]
    %v139 = vld [vmem:[#allocation2 + $0x220] sm:$0xff]
    %v140 = vld [vmem:[#allocation2 + $0x228] sm:$0xff]
    %v141 = vld [vmem:[#allocation2 + $0x230] sm:$0xff]
    %v142 = vld [vmem:[#allocation2 + $0x238] sm:$0xff]
    %v143 = vld [vmem:[#allocation2 + $0x240] sm:$0xff]
    %v144 = vld [vmem:[#allocation2 + $0x248] sm:$0xff]
    %v145 = vld [vmem:[#allocation2 + $0x250] sm:$0xff]
    %v146 = vld [vmem:[#allocation2 + $0x258] sm:$0xff]
    %v147 = vld [vmem:[#allocation2 + $0x260] sm:$0xff]
    %v148 = vld [vmem:[#allocation2 + $0x268] sm:$0xff]
    %v149 = vld [vmem:[#allocation2 + $0x270] sm:$0xff]
    %v150 = vld [vmem:[#allocation2 + $0x278] sm:$0xff]
    %v151 = vld [vmem:[#allocation2 + $0x280] sm:$0xff]
    %v152 = vld [vmem:[#allocation2 + $0x288] sm:$0xff]
    %v153 = vld [vmem:[#allocation2 + $0x290] sm:$0xff]
    %v154 = vld [vmem:[#allocation2 + $0x298] sm:$0xff]
    %v155 = vld [vmem:[#allocation2 + $0x2a0] sm:$0xff]
    %v156 = vld [vmem:[#allocation2 + $0x2a8] sm:$0xff]
    %v157 = vld [vmem:[#allocation2 + $0x2b0] sm:$0xff]
    %v158 = vld [vmem:[#allocation2 + $0x2b8] sm:$0xff]
    %v159 = vld [vmem:[#allocation2 + $0x2c0] sm:$0xff]
    %v160 = vld [vmem:[#allocation2 + $0x2c8] sm:$0xff]
    %v161 = vld [vmem:[#allocation2 + $0x2d0] sm:$0xff]
    %v162 = vld [vmem:[#allocation2 + $0x2d8] sm:$0xff]
    %v163 = vld [vmem:[#allocation2 + $0x2e0] sm:$0xff]
    %v164 = vld [vmem:[#allocation2 + $0x2e8] sm:$0xff]
    %v165 = vld [vmem:[#allocation2 + $0x2f0] sm:$0xff]
    %v166 = vld [vmem:[#allocation2 + $0x2f8] sm:$0xff]
    %v263 = vunpack.c.l.b16 %v71
    %v264 = vunpack.c.h.b16 %v71
    %v265 = vunpack.c.l.b16 %v72
    %v266 = vunpack.c.h.b16 %v72
    %v267 = vunpack.c.l.b16 %v73
    %v268 = vunpack.c.h.b16 %v73
    %v269 = vunpack.c.l.b16 %v74
    %v270 = vunpack.c.h.b16 %v74
    %v271 = vunpack.c.l.b16 %v75
    %v272 = vunpack.c.h.b16 %v75
    %v273 = vunpack.c.l.b16 %v76
    %v274 = vunpack.c.h.b16 %v76
    %v275 = vunpack.c.l.b16 %v77
    %v276 = vunpack.c.h.b16 %v77
    %v277 = vunpack.c.l.b16 %v78
    %v278 = vunpack.c.h.b16 %v78
    %v279 = vunpack.c.l.b16 %v79
    %v280 = vunpack.c.h.b16 %v79
    %v281 = vunpack.c.l.b16 %v80
    %v282 = vunpack.c.h.b16 %v80
    %v283 = vunpack.c.l.b16 %v81
    %v284 = vunpack.c.h.b16 %v81
    %v285 = vunpack.c.l.b16 %v82
    %v286 = vunpack.c.h.b16 %v82
    %v287 = vunpack.c.l.b16 %v83
    %v288 = vunpack.c.h.b16 %v83
    %v289 = vunpack.c.l.b16 %v84
    %v290 = vunpack.c.h.b16 %v84
    %v291 = vunpack.c.l.b16 %v85
    %v292 = vunpack.c.h.b16 %v85
    %v293 = vunpack.c.l.b16 %v86
    %v294 = vunpack.c.h.b16 %v86
    %v295 = vunpack.c.l.b16 %v87
    %v296 = vunpack.c.h.b16 %v87
    %v297 = vunpack.c.l.b16 %v88
    %v298 = vunpack.c.h.b16 %v88
    %v299 = vunpack.c.l.b16 %v89
    %v300 = vunpack.c.h.b16 %v89
    %v301 = vunpack.c.l.b16 %v90
    %v302 = vunpack.c.h.b16 %v90
    %v303 = vunpack.c.l.b16 %v91
    %v304 = vunpack.c.h.b16 %v91
    %v305 = vunpack.c.l.b16 %v92
    %v306 = vunpack.c.h.b16 %v92
    %v307 = vunpack.c.l.b16 %v93
    %v308 = vunpack.c.h.b16 %v93
    %v309 = vunpack.c.l.b16 %v94
    %v310 = vunpack.c.h.b16 %v94
    %v311 = vunpack.c.l.b16 %v95
    %v312 = vunpack.c.h.b16 %v95
    %v313 = vunpack.c.l.b16 %v96
    %v314 = vunpack.c.h.b16 %v96
    %v315 = vunpack.c.l.b16 %v97
    %v316 = vunpack.c.h.b16 %v97
    %v317 = vunpack.c.l.b16 %v98
    %v318 = vunpack.c.h.b16 %v98
    %v319 = vunpack.c.l.b16 %v99
    %v320 = vunpack.c.h.b16 %v99
    %v321 = vunpack.c.l.b16 %v100
    %v322 = vunpack.c.h.b16 %v100
    %v323 = vunpack.c.l.b16 %v101
    %v324 = vunpack.c.h.b16 %v101
    %v325 = vunpack.c.l.b16 %v102
    %v326 = vunpack.c.h.b16 %v102
    %v327 = vunpack.c.l.b16 %v103
    %v328 = vunpack.c.h.b16 %v103
    %v329 = vunpack.c.l.b16 %v104
    %v330 = vunpack.c.h.b16 %v104
    %v331 = vunpack.c.l.b16 %v105
    %v332 = vunpack.c.h.b16 %v105
    %v333 = vunpack.c.l.b16 %v106
    %v334 = vunpack.c.h.b16 %v106
    %v335 = vunpack.c.l.b16 %v107
    %v336 = vunpack.c.h.b16 %v107
    %v337 = vunpack.c.l.b16 %v108
    %v338 = vunpack.c.h.b16 %v108
    %v339 = vunpack.c.l.b16 %v109
    %v340 = vunpack.c.h.b16 %v109
    %v341 = vunpack.c.l.b16 %v110
    %v342 = vunpack.c.h.b16 %v110
    %v343 = vunpack.c.l.b16 %v111
    %v344 = vunpack.c.h.b16 %v111
    %v345 = vunpack.c.l.b16 %v112
    %v346 = vunpack.c.h.b16 %v112
    %v347 = vunpack.c.l.b16 %v113
    %v348 = vunpack.c.h.b16 %v113
    %v349 = vunpack.c.l.b16 %v114
    %v350 = vunpack.c.h.b16 %v114
    %v351 = vunpack.c.l.b16 %v115
    %v352 = vunpack.c.h.b16 %v115
    %v353 = vunpack.c.l.b16 %v116
    %v354 = vunpack.c.h.b16 %v116
    %v355 = vunpack.c.l.b16 %v117
    %v356 = vunpack.c.h.b16 %v117
    %v357 = vunpack.c.l.b16 %v118
    %v358 = vunpack.c.h.b16 %v118
    %v359 = vunpack.c.l.b16 %v119
    %v360 = vunpack.c.h.b16 %v119
    %v361 = vunpack.c.l.b16 %v120
    %v362 = vunpack.c.h.b16 %v120
    %v363 = vunpack.c.l.b16 %v121
    %v364 = vunpack.c.h.b16 %v121
    %v365 = vunpack.c.l.b16 %v122
    %v366 = vunpack.c.h.b16 %v122
    %v367 = vunpack.c.l.b16 %v123
    %v368 = vunpack.c.h.b16 %v123
    %v369 = vunpack.c.l.b16 %v124
    %v370 = vunpack.c.h.b16 %v124
    %v371 = vunpack.c.l.b16 %v125
    %v372 = vunpack.c.h.b16 %v125
    %v373 = vunpack.c.l.b16 %v126
    %v374 = vunpack.c.h.b16 %v126
    %v375 = vunpack.c.l.b16 %v127
    %v376 = vunpack.c.h.b16 %v127
    %v377 = vunpack.c.l.b16 %v128
    %v378 = vunpack.c.h.b16 %v128
    %v379 = vunpack.c.l.b16 %v129
    %v380 = vunpack.c.h.b16 %v129
    %v381 = vunpack.c.l.b16 %v130
    %v382 = vunpack.c.h.b16 %v130
    %v383 = vunpack.c.l.b16 %v131
    %v384 = vunpack.c.h.b16 %v131
    %v385 = vunpack.c.l.b16 %v132
    %v386 = vunpack.c.h.b16 %v132
    %v387 = vunpack.c.l.b16 %v133
    %v388 = vunpack.c.h.b16 %v133
    %v389 = vunpack.c.l.b16 %v134
    %v390 = vunpack.c.h.b16 %v134
    %v391 = vunpack.c.l.b16 %v135
    %v392 = vunpack.c.h.b16 %v135
    %v393 = vunpack.c.l.b16 %v136
    %v394 = vunpack.c.h.b16 %v136
    %v395 = vunpack.c.l.b16 %v137
    %v396 = vunpack.c.h.b16 %v137
    %v397 = vunpack.c.l.b16 %v138
    %v398 = vunpack.c.h.b16 %v138
    %v399 = vunpack.c.l.b16 %v139
    %v400 = vunpack.c.h.b16 %v139
    %v401 = vunpack.c.l.b16 %v140
    %v402 = vunpack.c.h.b16 %v140
    %v403 = vunpack.c.l.b16 %v141
    %v404 = vunpack.c.h.b16 %v141
    %v405 = vunpack.c.l.b16 %v142
    %v406 = vunpack.c.h.b16 %v142
    %v407 = vunpack.c.l.b16 %v143
    %v408 = vunpack.c.h.b16 %v143
    %v409 = vunpack.c.l.b16 %v144
    %v410 = vunpack.c.h.b16 %v144
    %v411 = vunpack.c.l.b16 %v145
    %v412 = vunpack.c.h.b16 %v145
    %v413 = vunpack.c.l.b16 %v146
    %v414 = vunpack.c.h.b16 %v146
    %v415 = vunpack.c.l.b16 %v147
    %v416 = vunpack.c.h.b16 %v147
    %v417 = vunpack.c.l.b16 %v148
    %v418 = vunpack.c.h.b16 %v148
    %v419 = vunpack.c.l.b16 %v149
    %v420 = vunpack.c.h.b16 %v149
    %v421 = vunpack.c.l.b16 %v150
    %v422 = vunpack.c.h.b16 %v150
    %v423 = vunpack.c.l.b16 %v151
    %v424 = vunpack.c.h.b16 %v151
    %v425 = vunpack.c.l.b16 %v152
    %v426 = vunpack.c.h.b16 %v152
    %v427 = vunpack.c.l.b16 %v153
    %v428 = vunpack.c.h.b16 %v153
    %v429 = vunpack.c.l.b16 %v154
    %v430 = vunpack.c.h.b16 %v154
    %v431 = vunpack.c.l.b16 %v155
    %v432 = vunpack.c.h.b16 %v155
    %v433 = vunpack.c.l.b16 %v156
    %v434 = vunpack.c.h.b16 %v156
    %v435 = vunpack.c.l.b16 %v157
    %v436 = vunpack.c.h.b16 %v157
    %v437 = vunpack.c.l.b16 %v158
    %v438 = vunpack.c.h.b16 %v158
    %v439 = vunpack.c.l.b16 %v159
    %v440 = vunpack.c.h.b16 %v159
    %v441 = vunpack.c.l.b16 %v160
    %v442 = vunpack.c.h.b16 %v160
    %v443 = vunpack.c.l.b16 %v161
    %v444 = vunpack.c.h.b16 %v161
    %v445 = vunpack.c.l.b16 %v162
    %v446 = vunpack.c.h.b16 %v162
    %v447 = vunpack.c.l.b16 %v163
    %v448 = vunpack.c.h.b16 %v163
    %v449 = vunpack.c.l.b16 %v164
    %v450 = vunpack.c.h.b16 %v164
    %v451 = vunpack.c.l.b16 %v165
    %v452 = vunpack.c.h.b16 %v165
    %v453 = vunpack.c.l.b16 %v166
    %v454 = vunpack.c.h.b16 %v166
    %v455 = vpack.c.b16 %v265, %v263
    %v456 = vpack.c.b16 %v266, %v264
    %v457 = vpack.c.b16 %v269, %v267
    %v458 = vpack.c.b16 %v270, %v268
    %v459 = vpack.c.b16 %v273, %v271
    %v460 = vpack.c.b16 %v274, %v272
    %v461 = vpack.c.b16 %v277, %v275
    %v462 = vpack.c.b16 %v278, %v276
    %v463 = vpack.c.b16 %v281, %v279
    %v464 = vpack.c.b16 %v282, %v280
    %v465 = vpack.c.b16 %v285, %v283
    %v466 = vpack.c.b16 %v286, %v284
    %v467 = vpack.c.b16 %v289, %v287
    %v468 = vpack.c.b16 %v290, %v288
    %v469 = vpack.c.b16 %v293, %v291
    %v470 = vpack.c.b16 %v294, %v292
    %v471 = vpack.c.b16 %v297, %v295
    %v472 = vpack.c.b16 %v298, %v296
    %v473 = vpack.c.b16 %v301, %v299
    %v474 = vpack.c.b16 %v302, %v300
    %v475 = vpack.c.b16 %v305, %v303
    %v476 = vpack.c.b16 %v306, %v304
    %v477 = vpack.c.b16 %v309, %v307
    %v478 = vpack.c.b16 %v310, %v308
    %v479 = vpack.c.b16 %v313, %v311
    %v480 = vpack.c.b16 %v314, %v312
    %v481 = vpack.c.b16 %v317, %v315
    %v482 = vpack.c.b16 %v318, %v316
    %v483 = vpack.c.b16 %v321, %v319
    %v484 = vpack.c.b16 %v322, %v320
    %v485 = vpack.c.b16 %v325, %v323
    %v486 = vpack.c.b16 %v326, %v324
    %v487 = vpack.c.b16 %v329, %v327
    %v488 = vpack.c.b16 %v330, %v328
    %v489 = vpack.c.b16 %v333, %v331
    %v490 = vpack.c.b16 %v334, %v332
    %v491 = vpack.c.b16 %v337, %v335
    %v492 = vpack.c.b16 %v338, %v336
    %v493 = vpack.c.b16 %v341, %v339
    %v494 = vpack.c.b16 %v342, %v340
    %v495 = vpack.c.b16 %v345, %v343
    %v496 = vpack.c.b16 %v346, %v344
    %v497 = vpack.c.b16 %v349, %v347
    %v498 = vpack.c.b16 %v350, %v348
    %v499 = vpack.c.b16 %v353, %v351
    %v500 = vpack.c.b16 %v354, %v352
    %v501 = vpack.c.b16 %v357, %v355
    %v502 = vpack.c.b16 %v358, %v356
    %v503 = vpack.c.b16 %v361, %v359
    %v504 = vpack.c.b16 %v362, %v360
    %v505 = vpack.c.b16 %v365, %v363
    %v506 = vpack.c.b16 %v366, %v364
    %v507 = vpack.c.b16 %v369, %v367
    %v508 = vpack.c.b16 %v370, %v368
    %v509 = vpack.c.b16 %v373, %v371
    %v510 = vpack.c.b16 %v374, %v372
    %v511 = vpack.c.b16 %v377, %v375
    %v512 = vpack.c.b16 %v378, %v376
    %v513 = vpack.c.b16 %v381, %v379
    %v514 = vpack.c.b16 %v382, %v380
    %v515 = vpack.c.b16 %v385, %v383
    %v516 = vpack.c.b16 %v386, %v384
    %v517 = vpack.c.b16 %v389, %v387
    %v518 = vpack.c.b16 %v390, %v388
    %v519 = vpack.c.b16 %v393, %v391
    %v520 = vpack.c.b16 %v394, %v392
    %v521 = vpack.c.b16 %v397, %v395
    %v522 = vpack.c.b16 %v398, %v396
    %v523 = vpack.c.b16 %v401, %v399
    %v524 = vpack.c.b16 %v402, %v400
    %v525 = vpack.c.b16 %v405, %v403
    %v526 = vpack.c.b16 %v406, %v404
    %v527 = vpack.c.b16 %v409, %v407
    %v528 = vpack.c.b16 %v410, %v408
    %v529 = vpack.c.b16 %v413, %v411
    %v530 = vpack.c.b16 %v414, %v412
    %v531 = vpack.c.b16 %v417, %v415
    %v532 = vpack.c.b16 %v418, %v416
    %v533 = vpack.c.b16 %v421, %v419
    %v534 = vpack.c.b16 %v422, %v420
    %v535 = vpack.c.b16 %v425, %v423
    %v536 = vpack.c.b16 %v426, %v424
    %v537 = vpack.c.b16 %v429, %v427
    %v538 = vpack.c.b16 %v430, %v428
    %v539 = vpack.c.b16 %v433, %v431
    %v540 = vpack.c.b16 %v434, %v432
    %v541 = vpack.c.b16 %v437, %v435
    %v542 = vpack.c.b16 %v438, %v436
    %v543 = vpack.c.b16 %v441, %v439
    %v544 = vpack.c.b16 %v442, %v440
    %v545 = vpack.c.b16 %v445, %v443
    %v546 = vpack.c.b16 %v446, %v444
    %v547 = vpack.c.b16 %v449, %v447
    %v548 = vpack.c.b16 %v450, %v448
    %v549 = vpack.c.b16 %v453, %v451
    %v550 = vpack.c.b16 %v454, %v452
    %647 = vmatprep.subr.bf16.mxu0 %v470
    %648 = vmatpush1.bf16.msra.mxu0 %v469
    %649 = vmatprep.subr.bf16.mxu0 %v468
    %650 = vmatpush1.bf16.msra.mxu0 %v467
    %651 = vmatprep.subr.bf16.mxu0 %v466
    %652 = vmatpush1.bf16.msra.mxu0 %v465
    %653 = vmatprep.subr.bf16.mxu0 %v464
    %654 = vmatpush1.bf16.msra.mxu0 %v463
    %655 = vmatprep.subr.bf16.mxu0 %v462
    %656 = vmatpush1.bf16.msra.mxu0 %v461
    %657 = vmatprep.subr.bf16.mxu0 %v460
    %658 = vmatpush1.bf16.msra.mxu0 %v459
    %659 = vmatprep.subr.bf16.mxu0 %v458
    %660 = vmatpush1.bf16.msra.mxu0 %v457
    %661 = vmatprep.subr.bf16.mxu0 %v456
    %662 = vmatpush1.bf16.msra.mxu0 %v455
    %663 = vmatprep.subr.bf16.mxu0 %v486
    %664 = vmatpush2.bf16.msra.mxu0 %v485
    %665 = vmatprep.subr.bf16.mxu0 %v484
    %666 = vmatpush2.bf16.msra.mxu0 %v483
    %667 = vmatprep.subr.bf16.mxu0 %v482
    %668 = vmatpush2.bf16.msra.mxu0 %v481
    %669 = vmatprep.subr.bf16.mxu0 %v480
    %670 = vmatpush2.bf16.msra.mxu0 %v479
    %671 = vmatprep.subr.bf16.mxu0 %v478
    %672 = vmatpush2.bf16.msra.mxu0 %v477
    %673 = vmatprep.subr.bf16.mxu0 %v476
    %674 = vmatpush2.bf16.msra.mxu0 %v475
    %675 = vmatprep.subr.bf16.mxu0 %v474
    %676 = vmatpush2.bf16.msra.mxu0 %v473
    %677 = vmatprep.subr.bf16.mxu0 %v472
    %678 = vmatpush2.bf16.msra.mxu0 %v471
    %679 = vmatprep.mubr.bf16.mxu0 %v66
    %680 = vmatmul.mubr.bf16.gmra.mxu0 %v65
    %v681 = vpop.f32.mrf.mxu0
    %v682 = vadd.f32 0.0, %v681
    %v683 = vpop.f32.mrf.mxu0
    %v684 = vadd.f32 0.0, %v683
    %v685 = vpop.f32.mrf.mxu0
    %v686 = vpop.f32.mrf.mxu0
    %687 = vdwg.mxu0
    %688 = vmatprep.subr.bf16.mxu0 %v502
    %689 = vmatpush1.bf16.msra.mxu0 %v501
    %690 = vmatprep.subr.bf16.mxu0 %v500
    %691 = vmatpush1.bf16.msra.mxu0 %v499
    %692 = vmatprep.subr.bf16.mxu0 %v498
    %693 = vmatpush1.bf16.msra.mxu0 %v497
    %694 = vmatprep.subr.bf16.mxu0 %v496
    %695 = vmatpush1.bf16.msra.mxu0 %v495
    %696 = vmatprep.subr.bf16.mxu0 %v494
    %697 = vmatpush1.bf16.msra.mxu0 %v493
    %698 = vmatprep.subr.bf16.mxu0 %v492
    %699 = vmatpush1.bf16.msra.mxu0 %v491
    %700 = vmatprep.subr.bf16.mxu0 %v490
    %701 = vmatpush1.bf16.msra.mxu0 %v489
    %702 = vmatprep.subr.bf16.mxu0 %v488
    %703 = vmatpush1.bf16.msra.mxu0 %v487
    %704 = vmatprep.subr.bf16.mxu0 %v518
    %705 = vmatpush2.bf16.msra.mxu0 %v517
    %706 = vmatprep.subr.bf16.mxu0 %v516
    %707 = vmatpush2.bf16.msra.mxu0 %v515
    %708 = vmatprep.subr.bf16.mxu0 %v514
    %709 = vmatpush2.bf16.msra.mxu0 %v513
    %710 = vmatprep.subr.bf16.mxu0 %v512
    %711 = vmatpush2.bf16.msra.mxu0 %v511
    %712 = vmatprep.subr.bf16.mxu0 %v510
    %713 = vmatpush2.bf16.msra.mxu0 %v509
    %714 = vmatprep.subr.bf16.mxu0 %v508
    %715 = vmatpush2.bf16.msra.mxu0 %v507
    %716 = vmatprep.subr.bf16.mxu0 %v506
    %717 = vmatpush2.bf16.msra.mxu0 %v505
    %718 = vmatprep.subr.bf16.mxu0 %v504
    %719 = vmatpush2.bf16.msra.mxu0 %v503
    %720 = vmatprep.mubr.bf16.mxu0 %v68
    %721 = vmatmul.mubr.bf16.gmra.mxu0 %v67
    %v722 = vpop.f32.mrf.mxu0
    %v723 = vadd.f32 %v682, %v722
    %v724 = vpop.f32.mrf.mxu0
    %v725 = vadd.f32 %v684, %v724
    %v726 = vpop.f32.mrf.mxu0
    %v727 = vpop.f32.mrf.mxu0
    %728 = vdwg.mxu0
    %729 = vmatprep.subr.bf16.mxu0 %v534
    %730 = vmatpush1.bf16.msra.mxu0 %v533
    %731 = vmatprep.subr.bf16.mxu0 %v532
    %732 = vmatpush1.bf16.msra.mxu0 %v531
    %733 = vmatprep.subr.bf16.mxu0 %v530
    %734 = vmatpush1.bf16.msra.mxu0 %v529
    %735 = vmatprep.subr.bf16.mxu0 %v528
    %736 = vmatpush1.bf16.msra.mxu0 %v527
    %737 = vmatprep.subr.bf16.mxu0 %v526
    %738 = vmatpush1.bf16.msra.mxu0 %v525
    %739 = vmatprep.subr.bf16.mxu0 %v524
    %740 = vmatpush1.bf16.msra.mxu0 %v523
    %741 = vmatprep.subr.bf16.mxu0 %v522
    %742 = vmatpush1.bf16.msra.mxu0 %v521
    %743 = vmatprep.subr.bf16.mxu0 %v520
    %744 = vmatpush1.bf16.msra.mxu0 %v519
    %745 = vmatprep.subr.bf16.mxu0 %v550
    %746 = vmatpush2.bf16.msra.mxu0 %v549
    %747 = vmatprep.subr.bf16.mxu0 %v548
    %748 = vmatpush2.bf16.msra.mxu0 %v547
    %749 = vmatprep.subr.bf16.mxu0 %v546
    %750 = vmatpush2.bf16.msra.mxu0 %v545
    %751 = vmatprep.subr.bf16.mxu0 %v544
    %752 = vmatpush2.bf16.msra.mxu0 %v543
    %753 = vmatprep.subr.bf16.mxu0 %v542
    %754 = vmatpush2.bf16.msra.mxu0 %v541
    %755 = vmatprep.subr.bf16.mxu0 %v540
    %756 = vmatpush2.bf16.msra.mxu0 %v539
    %757 = vmatprep.subr.bf16.mxu0 %v538
    %758 = vmatpush2.bf16.msra.mxu0 %v537
    %759 = vmatprep.subr.bf16.mxu0 %v536
    %760 = vmatpush2.bf16.msra.mxu0 %v535
    %761 = vmatprep.mubr.bf16.mxu0 %v70
    %762 = vmatmul.mubr.bf16.gmra.mxu0 %v69
    %v763 = vpop.f32.mrf.mxu0
    %v764 = vadd.f32 %v723, %v763
    %v765 = vpop.f32.mrf.mxu0
    %v766 = vadd.f32 %v725, %v765
    %v767 = vpop.f32.mrf.mxu0
    %v768 = vpop.f32.mrf.mxu0
    %769 = vdwg.mxu0
    %v770 = vld [vmem:[%s4] sm:$0xff]
    %v771 = vld [vmem:[%s4 + $0x8] sm:$0xff]
    %v772 = vld [vmem:[%s4 + $0x10] sm:$0xff]
    %v773 = vld [vmem:[%s4 + $0x18] sm:$0xff]
    %v774 = vld [vmem:[%s4 + $0x20] sm:$0xff]
    %v775 = vld [vmem:[%s4 + $0x28] sm:$0xff]
    %v776 = vld [vmem:[%s4 + $0x30] sm:$0xff]
    %v777 = vld [vmem:[%s4 + $0x38] sm:$0xff]
    %v778 = vld [vmem:[%s4 + $0x40] sm:$0xff]
    %v779 = vld [vmem:[%s4 + $0x48] sm:$0xff]
    %v780 = vld [vmem:[%s4 + $0x50] sm:$0xff]
    %v781 = vld [vmem:[%s4 + $0x58] sm:$0xff]
    %v782 = vld [vmem:[%s4 + $0x60] sm:$0xff]
    %v783 = vld [vmem:[%s4 + $0x68] sm:$0xff]
    %v784 = vld [vmem:[%s4 + $0x70] sm:$0xff]
    %v785 = vld [vmem:[%s4 + $0x78] sm:$0xff]
    %v786 = vld [vmem:[%s7] sm:$0xf]
    %v787 = vld [vmem:[%s7 + $0x4] sm:$0xf]
    %v788 = vld [vmem:[%s7 + $0x8] sm:$0xf]
    %v789 = vld [vmem:[%s7 + $0xc] sm:$0xf]
    %v790 = vld [vmem:[%s7 + $0x10] sm:$0xf]
    %v791 = vld [vmem:[%s7 + $0x14] sm:$0xf]
    %v792 = vld [vmem:[%s7 + $0x18] sm:$0xf]
    %v793 = vld [vmem:[%s7 + $0x1c] sm:$0xf]
    %v794 = vld [vmem:[%s7 + $0x20] sm:$0xf]
    %v795 = vld [vmem:[%s7 + $0x24] sm:$0xf]
    %v796 = vld [vmem:[%s7 + $0x28] sm:$0xf]
    %v797 = vld [vmem:[%s7 + $0x2c] sm:$0xf]
    %v798 = vld [vmem:[%s7 + $0x30] sm:$0xf]
    %v799 = vld [vmem:[%s7 + $0x34] sm:$0xf]
    %v800 = vld [vmem:[%s7 + $0x38] sm:$0xf]
    %v801 = vld [vmem:[%s7 + $0x3c] sm:$0xf]
    %v802 = vld [vmem:[%s7 + $0x40] sm:$0xf]
    %v803 = vld [vmem:[%s7 + $0x44] sm:$0xf]
    %v804 = vld [vmem:[%s7 + $0x48] sm:$0xf]
    %v805 = vld [vmem:[%s7 + $0x4c] sm:$0xf]
    %v806 = vld [vmem:[%s7 + $0x50] sm:$0xf]
    %v807 = vld [vmem:[%s7 + $0x54] sm:$0xf]
    %v808 = vld [vmem:[%s7 + $0x58] sm:$0xf]
    %v809 = vld [vmem:[%s7 + $0x5c] sm:$0xf]
    %v810 = vld [vmem:[%s7 + $0x60] sm:$0xf]
    %v811 = vld [vmem:[%s7 + $0x64] sm:$0xf]
    %v812 = vld [vmem:[%s7 + $0x68] sm:$0xf]
    %v813 = vld [vmem:[%s7 + $0x6c] sm:$0xf]
    %v814 = vld [vmem:[%s7 + $0x70] sm:$0xf]
    %v815 = vld [vmem:[%s7 + $0x74] sm:$0xf]
    %v816 = vld [vmem:[%s7 + $0x78] sm:$0xf]
    %v817 = vld [vmem:[%s7 + $0x7c] sm:$0xf]
    %v818 = vld [vmem:[%s6] sm:$0xff]
    %v819 = vld [vmem:[%s6 + $0x8] sm:$0xff]
    %v820 = vld [vmem:[#allocation4] sm:$0xff]
    %v821 = vld [vmem:[%s1] sm:$0xff]
    %v822 = vld [vmem:[%s2] sm:$0xff]
    %v823 = vadd.f32 %v821, %v822
    %v824 = vpack.c.bf16 %v823, %v823
    %v841 = vunpack.c.l.b16 %v770
    %v842 = vunpack.c.h.b16 %v770
    %v843 = vunpack.c.l.b16 %v771
    %v844 = vunpack.c.h.b16 %v771
    %v845 = vunpack.c.l.b16 %v772
    %v846 = vunpack.c.h.b16 %v772
    %v847 = vunpack.c.l.b16 %v773
    %v848 = vunpack.c.h.b16 %v773
    %v849 = vunpack.c.l.b16 %v774
    %v850 = vunpack.c.h.b16 %v774
    %v851 = vunpack.c.l.b16 %v775
    %v852 = vunpack.c.h.b16 %v775
    %v853 = vunpack.c.l.b16 %v776
    %v854 = vunpack.c.h.b16 %v776
    %v855 = vunpack.c.l.b16 %v777
    %v856 = vunpack.c.h.b16 %v777
    %v857 = vunpack.c.l.b16 %v778
    %v858 = vunpack.c.h.b16 %v778
    %v859 = vunpack.c.l.b16 %v779
    %v860 = vunpack.c.h.b16 %v779
    %v861 = vunpack.c.l.b16 %v780
    %v862 = vunpack.c.h.b16 %v780
    %v863 = vunpack.c.l.b16 %v781
    %v864 = vunpack.c.h.b16 %v781
    %v865 = vunpack.c.l.b16 %v782
    %v866 = vunpack.c.h.b16 %v782
    %v867 = vunpack.c.l.b16 %v783
    %v868 = vunpack.c.h.b16 %v783
    %v869 = vunpack.c.l.b16 %v784
    %v870 = vunpack.c.h.b16 %v784
    %v871 = vunpack.c.l.b16 %v785
    %v872 = vunpack.c.h.b16 %v785
    %v873 = vpack.c.b16 %v843, %v841
    %v874 = vpack.c.b16 %v844, %v842
    %v875 = vpack.c.b16 %v847, %v845
    %v876 = vpack.c.b16 %v848, %v846
    %v877 = vpack.c.b16 %v851, %v849
    %v878 = vpack.c.b16 %v852, %v850
    %v879 = vpack.c.b16 %v855, %v853
    %v880 = vpack.c.b16 %v856, %v854
    %v881 = vpack.c.b16 %v859, %v857
    %v882 = vpack.c.b16 %v860, %v858
    %v883 = vpack.c.b16 %v863, %v861
    %v884 = vpack.c.b16 %v864, %v862
    %v885 = vpack.c.b16 %v867, %v865
    %v886 = vpack.c.b16 %v868, %v866
    %v887 = vpack.c.b16 %v871, %v869
    %v888 = vpack.c.b16 %v872, %v870
    %905 = vmatprep.subr.bf16.mxu0 %v888
    %906 = vmatpush1.bf16.msra.mxu0 %v887
    %907 = vmatprep.subr.bf16.mxu0 %v886
    %908 = vmatpush1.bf16.msra.mxu0 %v885
    %909 = vmatprep.subr.bf16.mxu0 %v884
    %910 = vmatpush1.bf16.msra.mxu0 %v883
    %911 = vmatprep.subr.bf16.mxu0 %v882
    %912 = vmatpush1.bf16.msra.mxu0 %v881
    %913 = vmatprep.subr.bf16.mxu0 %v880
    %914 = vmatpush1.bf16.msra.mxu0 %v879
    %915 = vmatprep.subr.bf16.mxu0 %v878
    %916 = vmatpush1.bf16.msra.mxu0 %v877
    %917 = vmatprep.subr.bf16.mxu0 %v876
    %918 = vmatpush1.bf16.msra.mxu0 %v875
    %919 = vmatprep.subr.bf16.mxu0 %v874
    %920 = vmatpush1.bf16.msra.mxu0 %v873
    %921 = vmatprep.subr.bf16.mxu0 0
    %922 = vmatpush2.bf16.msra.mxu0 0
    %923 = vmatprep.subr.bf16.mxu0 0
    %924 = vmatpush2.bf16.msra.mxu0 0
    %925 = vmatprep.subr.bf16.mxu0 0
    %926 = vmatpush2.bf16.msra.mxu0 0
    %927 = vmatprep.subr.bf16.mxu0 0
    %928 = vmatpush2.bf16.msra.mxu0 0
    %929 = vmatprep.subr.bf16.mxu0 0
    %930 = vmatpush2.bf16.msra.mxu0 0
    %931 = vmatprep.subr.bf16.mxu0 0
    %932 = vmatpush2.bf16.msra.mxu0 0
    %933 = vmatprep.subr.bf16.mxu0 0
    %934 = vmatpush2.bf16.msra.mxu0 0
    %935 = vmatprep.subr.bf16.mxu0 0
    %936 = vmatpush2.bf16.msra.mxu0 0
    %937 = vmatprep.mubr.bf16.mxu0 0
    %938 = vmatmul.mubr.bf16.gmra.mxu0 %v824
    %v939 = vpop.f32.mrf.mxu0
    %v940 = vadd.f32 %v764, %v939
    %v941 = vpop.f32.mrf.mxu0
    %v942 = vadd.f32 %v766, %v941
    %v943 = vpop.f32.mrf.mxu0
    %v944 = vpop.f32.mrf.mxu0
    %945 = vdwg.mxu0
    %v946 = vadd.f32 %v940, %v818
    %v947 = vadd.f32 %v942, %v819
    %v948 = vmax.f32 %v946, 0.0
    %v949 = vmax.f32 %v947, 0.0
    %v950 = vpack.c.bf16 %v948, %v948
    %v951 = vpack.c.bf16 %v949, %v949
    %v984 = vunpack.c.l.b16 %v786
    %v985 = vunpack.c.l.b16 %v787
    %v986 = vunpack.c.l.b16 %v788
    %v987 = vunpack.c.l.b16 %v789
    %v988 = vunpack.c.l.b16 %v790
    %v989 = vunpack.c.l.b16 %v791
    %v990 = vunpack.c.l.b16 %v792
    %v991 = vunpack.c.l.b16 %v793
    %v992 = vunpack.c.l.b16 %v794
    %v993 = vunpack.c.l.b16 %v795
    %v994 = vunpack.c.l.b16 %v796
    %v995 = vunpack.c.l.b16 %v797
    %v996 = vunpack.c.l.b16 %v798
    %v997 = vunpack.c.l.b16 %v799
    %v998 = vunpack.c.l.b16 %v800
    %v999 = vunpack.c.l.b16 %v801
    %v1000 = vunpack.c.l.b16 %v802
    %v1001 = vunpack.c.l.b16 %v803
    %v1002 = vunpack.c.l.b16 %v804
    %v1003 = vunpack.c.l.b16 %v805
    %v1004 = vunpack.c.l.b16 %v806
    %v1005 = vunpack.c.l.b16 %v807
    %v1006 = vunpack.c.l.b16 %v808
    %v1007 = vunpack.c.l.b16 %v809
    %v1008 = vunpack.c.l.b16 %v810
    %v1009 = vunpack.c.l.b16 %v811
    %v1010 = vunpack.c.l.b16 %v812
    %v1011 = vunpack.c.l.b16 %v813
    %v1012 = vunpack.c.l.b16 %v814
    %v1013 = vunpack.c.l.b16 %v815
    %v1014 = vunpack.c.l.b16 %v816
    %v1015 = vunpack.c.l.b16 %v817
    %v1016 = vpack.c.b16 %v985, %v984
    %v1017 = vpack.c.b16 %v987, %v986
    %v1018 = vpack.c.b16 %v989, %v988
    %v1019 = vpack.c.b16 %v991, %v990
    %v1020 = vpack.c.b16 %v993, %v992
    %v1021 = vpack.c.b16 %v995, %v994
    %v1022 = vpack.c.b16 %v997, %v996
    %v1023 = vpack.c.b16 %v999, %v998
    %v1024 = vpack.c.b16 %v1001, %v1000
    %v1025 = vpack.c.b16 %v1003, %v1002
    %v1026 = vpack.c.b16 %v1005, %v1004
    %v1027 = vpack.c.b16 %v1007, %v1006
    %v1028 = vpack.c.b16 %v1009, %v1008
    %v1029 = vpack.c.b16 %v1011, %v1010
    %v1030 = vpack.c.b16 %v1013, %v1012
    %v1031 = vpack.c.b16 %v1015, %v1014
    %1048 = vmatprep.subr.bf16.mxu0 0
    %1049 = vmatpush1.bf16.msra.mxu0 %v1023
    %1050 = vmatprep.subr.bf16.mxu0 0
    %1051 = vmatpush1.bf16.msra.mxu0 %v1022
    %1052 = vmatprep.subr.bf16.mxu0 0
    %1053 = vmatpush1.bf16.msra.mxu0 %v1021
    %1054 = vmatprep.subr.bf16.mxu0 0
    %1055 = vmatpush1.bf16.msra.mxu0 %v1020
    %1056 = vmatprep.subr.bf16.mxu0 0
    %1057 = vmatpush1.bf16.msra.mxu0 %v1019
    %1058 = vmatprep.subr.bf16.mxu0 0
    %1059 = vmatpush1.bf16.msra.mxu0 %v1018
    %1060 = vmatprep.subr.bf16.mxu0 0
    %1061 = vmatpush1.bf16.msra.mxu0 %v1017
    %1062 = vmatprep.subr.bf16.mxu0 0
    %1063 = vmatpush1.bf16.msra.mxu0 %v1016
    %1064 = vmatprep.subr.bf16.mxu0 0
    %1065 = vmatpush2.bf16.msra.mxu0 %v1031
    %1066 = vmatprep.subr.bf16.mxu0 0
    %1067 = vmatpush2.bf16.msra.mxu0 %v1030
    %1068 = vmatprep.subr.bf16.mxu0 0
    %1069 = vmatpush2.bf16.msra.mxu0 %v1029
    %1070 = vmatprep.subr.bf16.mxu0 0
    %1071 = vmatpush2.bf16.msra.mxu0 %v1028
    %1072 = vmatprep.subr.bf16.mxu0 0
    %1073 = vmatpush2.bf16.msra.mxu0 %v1027
    %1074 = vmatprep.subr.bf16.mxu0 0
    %1075 = vmatpush2.bf16.msra.mxu0 %v1026
    %1076 = vmatprep.subr.bf16.mxu0 0
    %1077 = vmatpush2.bf16.msra.mxu0 %v1025
    %1078 = vmatprep.subr.bf16.mxu0 0
    %1079 = vmatpush2.bf16.msra.mxu0 %v1024
    %1080 = vmatprep.mubr.bf16.mxu0 %v951
    %1081 = vmatmul.mubr.bf16.gmra.mxu0 %v950
    %v1082 = vpop.f32.mrf.mxu0
    %v1083 = vadd.f32 %v820, %v1082
    %v1084 = vpop.f32.mrf.mxu0
    %v1085 = vpop.f32.mrf.mxu0
    %v1086 = vpop.f32.mrf.mxu0
    %1087 = vdwg.mxu0
    %v1088 = vmul.f32 %v1083, 0.24941406
    %v1089 = vmul.f32 %v821, 0.7504325
    %v1090 = vadd.f32 %v1088, %v1089
    %v1091 = vld [vmem:[%s3] sm:$0xff]
    %v1092 = vadd.f32 %v1090, %v1091
    %1093 = vst [vmem:[%s9] sm:$0xff] %v1092
    %v1094 = vld [vmem:[%s2 + $0x8] sm:$0xff]
    %v1095 = vadd.f32 %v1092, %v1094
    %v1096 = vpack.c.bf16 %v1095, %v1095
    %1097 = vmatprep.subr.bf16.mxu0 %v888
    %1098 = vmatpush1.bf16.msra.mxu0 %v887
    %1099 = vmatprep.subr.bf16.mxu0 %v886
    %1100 = vmatpush1.bf16.msra.mxu0 %v885
    %1101 = vmatprep.subr.bf16.mxu0 %v884
    %1102 = vmatpush1.bf16.msra.mxu0 %v883
    %1103 = vmatprep.subr.bf16.mxu0 %v882
    %1104 = vmatpush1.bf16.msra.mxu0 %v881
    %1105 = vmatprep.subr.bf16.mxu0 %v880
    %1106 = vmatpush1.bf16.msra.mxu0 %v879
    %1107 = vmatprep.subr.bf16.mxu0 %v878
    %1108 = vmatpush1.bf16.msra.mxu0 %v877
    %1109 = vmatprep.subr.bf16.mxu0 %v876
    %1110 = vmatpush1.bf16.msra.mxu0 %v875
    %1111 = vmatprep.subr.bf16.mxu0 %v874
    %1112 = vmatpush1.bf16.msra.mxu0 %v873
    %1113 = vmatprep.subr.bf16.mxu0 0
    %1114 = vmatpush2.bf16.msra.mxu0 0
    %1115 = vmatprep.subr.bf16.mxu0 0
    %1116 = vmatpush2.bf16.msra.mxu0 0
    %1117 = vmatprep.subr.bf16.mxu0 0
    %1118 = vmatpush2.bf16.msra.mxu0 0
    %1119 = vmatprep.subr.bf16.mxu0 0
    %1120 = vmatpush2.bf16.msra.mxu0 0
    %1121 = vmatprep.subr.bf16.mxu0 0
    %1122 = vmatpush2.bf16.msra.mxu0 0
    %1123 = vmatprep.subr.bf16.mxu0 0
    %1124 = vmatpush2.bf16.msra.mxu0 0
    %1125 = vmatprep.subr.bf16.mxu0 0
    %1126 = vmatpush2.bf16.msra.mxu0 0
    %1127 = vmatprep.subr.bf16.mxu0 0
    %1128 = vmatpush2.bf16.msra.mxu0 0
    %1129 = vmatprep.mubr.bf16.mxu0 0
    %1130 = vmatmul.mubr.bf16.gmra.mxu0 %v1096
    %v1131 = vpop.f32.mrf.mxu0
    %v1132 = vadd.f32 %v764, %v1131
    %v1133 = vpop.f32.mrf.mxu0
    %v1134 = vadd.f32 %v766, %v1133
    %v1135 = vpop.f32.mrf.mxu0
    %v1136 = vpop.f32.mrf.mxu0
    %1137 = vdwg.mxu0
    %v1138 = vadd.f32 %v1132, %v818
    %v1139 = vadd.f32 %v1134, %v819
    %v1140 = vmax.f32 %v1138, 0.0
    %v1141 = vmax.f32 %v1139, 0.0
    %v1142 = vpack.c.bf16 %v1140, %v1140
    %v1143 = vpack.c.bf16 %v1141, %v1141
    %1144 = vmatprep.subr.bf16.mxu0 0
    %1145 = vmatpush1.bf16.msra.mxu0 %v1023
    %1146 = vmatprep.subr.bf16.mxu0 0
    %1147 = vmatpush1.bf16.msra.mxu0 %v1022
    %1148 = vmatprep.subr.bf16.mxu0 0
    %1149 = vmatpush1.bf16.msra.mxu0 %v1021
    %1150 = vmatprep.subr.bf16.mxu0 0
    %1151 = vmatpush1.bf16.msra.mxu0 %v1020
    %1152 = vmatprep.subr.bf16.mxu0 0
    %1153 = vmatpush1.bf16.msra.mxu0 %v1019
    %1154 = vmatprep.subr.bf16.mxu0 0
    %1155 = vmatpush1.bf16.msra.mxu0 %v1018
    %1156 = vmatprep.subr.bf16.mxu0 0
    %1157 = vmatpush1.bf16.msra.mxu0 %v1017
    %1158 = vmatprep.subr.bf16.mxu0 0
    %1159 = vmatpush1.bf16.msra.mxu0 %v1016
    %1160 = vmatprep.subr.bf16.mxu0 0
    %1161 = vmatpush2.bf16.msra.mxu0 %v1031
    %1162 = vmatprep.subr.bf16.mxu0 0
    %1163 = vmatpush2.bf16.msra.mxu0 %v1030
    %1164 = vmatprep.subr.bf16.mxu0 0
    %1165 = vmatpush2.bf16.msra.mxu0 %v1029
    %1166 = vmatprep.subr.bf16.mxu0 0
    %1167 = vmatpush2.bf16.msra.mxu0 %v1028
    %1168 = vmatprep.subr.bf16.mxu0 0
    %1169 = vmatpush2.bf16.msra.mxu0 %v1027
    %1170 = vmatprep.subr.bf16.mxu0 0
    %1171 = vmatpush2.bf16.msra.mxu0 %v1026
    %1172 = vmatprep.subr.bf16.mxu0 0
    %1173 = vmatpush2.bf16.msra.mxu0 %v1025
    %1174 = vmatprep.subr.bf16.mxu0 0
    %1175 = vmatpush2.bf16.msra.mxu0 %v1024
    %1176 = vmatprep.mubr.bf16.mxu0 %v1143
    %1177 = vmatmul.mubr.bf16.gmra.mxu0 %v1142
    %v1178 = vpop.f32.mrf.mxu0
    %v1179 = vadd.f32 %v820, %v1178
    %v1180 = vpop.f32.mrf.mxu0
    %v1181 = vpop.f32.mrf.mxu0
    %v1182 = vpop.f32.mrf.mxu0
    %1183 = vdwg.mxu0
    %v1184 = vmul.f32 %v1179, 0.2847051
    %v1185 = vmul.f32 %v1092, 0.71520084
    %v1186 = vadd.f32 %v1184, %v1185
    %v1187 = vld [vmem:[%s3 + $0x8] sm:$0xff]
    %v1188 = vadd.f32 %v1186, %v1187
    %1189 = vst [vmem:[%s9 + $0x8] sm:$0xff] %v1188
    %v1190 = vld [vmem:[%s2 + $0x10] sm:$0xff]
    %v1191 = vadd.f32 %v1188, %v1190
    %v1192 = vpack.c.bf16 %v1191, %v1191
    %1193 = vmatprep.subr.bf16.mxu0 %v888
    %1194 = vmatpush1.bf16.msra.mxu0 %v887
    %1195 = vmatprep.subr.bf16.mxu0 %v886
    %1196 = vmatpush1.bf16.msra.mxu0 %v885
    %1197 = vmatprep.subr.bf16.mxu0 %v884
    %1198 = vmatpush1.bf16.msra.mxu0 %v883
    %1199 = vmatprep.subr.bf16.mxu0 %v882
    %1200 = vmatpush1.bf16.msra.mxu0 %v881
    %1201 = vmatprep.subr.bf16.mxu0 %v880
    %1202 = vmatpush1.bf16.msra.mxu0 %v879
    %1203 = vmatprep.subr.bf16.mxu0 %v878
    %1204 = vmatpush1.bf16.msra.mxu0 %v877
    %1205 = vmatprep.subr.bf16.mxu0 %v876
    %1206 = vmatpush1.bf16.msra.mxu0 %v875
    %1207 = vmatprep.subr.bf16.mxu0 %v874
    %1208 = vmatpush1.bf16.msra.mxu0 %v873
    %1209 = vmatprep.subr.bf16.mxu0 0
    %1210 = vmatpush2.bf16.msra.mxu0 0
    %1211 = vmatprep.subr.bf16.mxu0 0
    %1212 = vmatpush2.bf16.msra.mxu0 0
    %1213 = vmatprep.subr.bf16.mxu0 0
    %1214 = vmatpush2.bf16.msra.mxu0 0
    %1215 = vmatprep.subr.bf16.mxu0 0
    %1216 = vmatpush2.bf16.msra.mxu0 0
    %1217 = vmatprep.subr.bf16.mxu0 0
    %1218 = vmatpush2.bf16.msra.mxu0 0
    %1219 = vmatprep.subr.bf16.mxu0 0
    %1220 = vmatpush2.bf16.msra.mxu0 0
    %1221 = vmatprep.subr.bf16.mxu0 0
    %1222 = vmatpush2.bf16.msra.mxu0 0
    %1223 = vmatprep.subr.bf16.mxu0 0
    %1224 = vmatpush2.bf16.msra.mxu0 0
    %1225 = vmatprep.mubr.bf16.mxu0 0
    %1226 = vmatmul.mubr.bf16.gmra.mxu0 %v1192
    %v1227 = vpop.f32.mrf.mxu0
    %v1228 = vadd.f32 %v764, %v1227
    %v1229 = vpop.f32.mrf.mxu0
    %v1230 = vadd.f32 %v766, %v1229
    %v1231 = vpop.f32.mrf.mxu0
    %v1232 = vpop.f32.mrf.mxu0
    %1233 = vdwg.mxu0
    %v1234 = vadd.f32 %v1228, %v818
    %v1235 = vadd.f32 %v1230, %v819
    %v1236 = vmax.f32 %v1234, 0.0
    %v1237 = vmax.f32 %v1235, 0.0
    %v1238 = vpack.c.bf16 %v1236, %v1236
    %v1239 = vpack.c.bf16 %v1237, %v1237
    %1240 = vmatprep.subr.bf16.mxu0 0
    %1241 = vmatpush1.bf16.msra.mxu0 %v1023
    %1242 = vmatprep.subr.bf16.mxu0 0
    %1243 = vmatpush1.bf16.msra.mxu0 %v1022
    %1244 = vmatprep.subr.bf16.mxu0 0
    %1245 = vmatpush1.bf16.msra.mxu0 %v1021
    %1246 = vmatprep.subr.bf16.mxu0 0
    %1247 = vmatpush1.bf16.msra.mxu0 %v1020
    %1248 = vmatprep.subr.bf16.mxu0 0
    %1249 = vmatpush1.bf16.msra.mxu0 %v1019
    %1250 = vmatprep.subr.bf16.mxu0 0
    %1251 = vmatpush1.bf16.msra.mxu0 %v1018
    %1252 = vmatprep.subr.bf16.mxu0 0
    %1253 = vmatpush1.bf16.msra.mxu0 %v1017
    %1254 = vmatprep.subr.bf16.mxu0 0
    %1255 = vmatpush1.bf16.msra.mxu0 %v1016
    %1256 = vmatprep.subr.bf16.mxu0 0
    %1257 = vmatpush2.bf16.msra.mxu0 %v1031
    %1258 = vmatprep.subr.bf16.mxu0 0
    %1259 = vmatpush2.bf16.msra.mxu0 %v1030
    %1260 = vmatprep.subr.bf16.mxu0 0
    %1261 = vmatpush2.bf16.msra.mxu0 %v1029
    %1262 = vmatprep.subr.bf16.mxu0 0
    %1263 = vmatpush2.bf16.msra.mxu0 %v1028
    %1264 = vmatprep.subr.bf16.mxu0 0
    %1265 = vmatpush2.bf16.msra.mxu0 %v1027
    %1266 = vmatprep.subr.bf16.mxu0 0
    %1267 = vmatpush2.bf16.msra.mxu0 %v1026
    %1268 = vmatprep.subr.bf16.mxu0 0
    %1269 = vmatpush2.bf16.msra.mxu0 %v1025
    %1270 = vmatprep.subr.bf16.mxu0 0
    %1271 = vmatpush2.bf16.msra.mxu0 %v1024
    %1272 = vmatprep.mubr.bf16.mxu0 %v1239
    %1273 = vmatmul.mubr.bf16.gmra.mxu0 %v1238
    %v1274 = vpop.f32.mrf.mxu0
    %v1275 = vadd.f32 %v820, %v1274
    %v1276 = vpop.f32.mrf.mxu0
    %v1277 = vpop.f32.mrf.mxu0
    %v1278 = vpop.f32.mrf.mxu0
    %1279 = vdwg.mxu0
    %v1280 = vmul.f32 %v1275, 0.33163837
    %v1281 = vmul.f32 %v1188, 0.6683093
    %v1282 = vadd.f32 %v1280, %v1281
    %v1283 = vld [vmem:[%s3 + $0x10] sm:$0xff]
    %v1284 = vadd.f32 %v1282, %v1283
    %1285 = vst [vmem:[%s9 + $0x10] sm:$0xff] %v1284
    %v1286 = vld [vmem:[%s2 + $0x18] sm:$0xff]
    %v1287 = vadd.f32 %v1284, %v1286
    %v1288 = vpack.c.bf16 %v1287, %v1287
    %1289 = vmatprep.subr.bf16.mxu0 %v888
    %1290 = vmatpush1.bf16.msra.mxu0 %v887
    %1291 = vmatprep.subr.bf16.mxu0 %v886
    %1292 = vmatpush1.bf16.msra.mxu0 %v885
    %1293 = vmatprep.subr.bf16.mxu0 %v884
    %1294 = vmatpush1.bf16.msra.mxu0 %v883
    %1295 = vmatprep.subr.bf16.mxu0 %v882
    %1296 = vmatpush1.bf16.msra.mxu0 %v881
    %1297 = vmatprep.subr.bf16.mxu0 %v880
    %1298 = vmatpush1.bf16.msra.mxu0 %v879
    %1299 = vmatprep.subr.bf16.mxu0 %v878
    %1300 = vmatpush1.bf16.msra.mxu0 %v877
    %1301 = vmatprep.subr.bf16.mxu0 %v876
    %1302 = vmatpush1.bf16.msra.mxu0 %v875
    %1303 = vmatprep.subr.bf16.mxu0 %v874
    %1304 = vmatpush1.bf16.msra.mxu0 %v873
    %1305 = vmatprep.subr.bf16.mxu0 0
    %1306 = vmatpush2.bf16.msra.mxu0 0
    %1307 = vmatprep.subr.bf16.mxu0 0
    %1308 = vmatpush2.bf16.msra.mxu0 0
    %1309 = vmatprep.subr.bf16.mxu0 0
    %1310 = vmatpush2.bf16.msra.mxu0 0
    %1311 = vmatprep.subr.bf16.mxu0 0
    %1312 = vmatpush2.bf16.msra.mxu0 0
    %1313 = vmatprep.subr.bf16.mxu0 0
    %1314 = vmatpush2.bf16.msra.mxu0 0
    %1315 = vmatprep.subr.bf16.mxu0 0
    %1316 = vmatpush2.bf16.msra.mxu0 0
    %1317 = vmatprep.subr.bf16.mxu0 0
    %1318 = vmatpush2.bf16.msra.mxu0 0
    %1319 = vmatprep.subr.bf16.mxu0 0
    %1320 = vmatpush2.bf16.msra.mxu0 0
    %1321 = vmatprep.mubr.bf16.mxu0 0
    %1322 = vmatmul.mubr.bf16.gmra.mxu0 %v1288
    %v1323 = vpop.f32.mrf.mxu0
    %v1324 = vadd.f32 %v764, %v1323
    %v1325 = vpop.f32.mrf.mxu0
    %v1326 = vadd.f32 %v766, %v1325
    %v1327 = vpop.f32.mrf.mxu0
    %v1328 = vpop.f32.mrf.mxu0
    %1329 = vdwg.mxu0
    %v1330 = vadd.f32 %v1324, %v818
    %v1331 = vadd.f32 %v1326, %v819
    %v1332 = vmax.f32 %v1330, 0.0
    %v1333 = vmax.f32 %v1331, 0.0
    %v1334 = vpack.c.bf16 %v1332, %v1332
    %v1335 = vpack.c.bf16 %v1333, %v1333
    %1336 = vmatprep.subr.bf16.mxu0 0
    %1337 = vmatpush1.bf16.msra.mxu0 %v1023
    %1338 = vmatprep.subr.bf16.mxu0 0
    %1339 = vmatpush1.bf16.msra.mxu0 %v1022
    %1340 = vmatprep.subr.bf16.mxu0 0
    %1341 = vmatpush1.bf16.msra.mxu0 %v1021
    %1342 = vmatprep.subr.bf16.mxu0 0
    %1343 = vmatpush1.bf16.msra.mxu0 %v1020
    %1344 = vmatprep.subr.bf16.mxu0 0
    %1345 = vmatpush1.bf16.msra.mxu0 %v1019
    %1346 = vmatprep.subr.bf16.mxu0 0
    %1347 = vmatpush1.bf16.msra.mxu0 %v1018
    %1348 = vmatprep.subr.bf16.mxu0 0
    %1349 = vmatpush1.bf16.msra.mxu0 %v1017
    %1350 = vmatprep.subr.bf16.mxu0 0
    %1351 = vmatpush1.bf16.msra.mxu0 %v1016
    %1352 = vmatprep.subr.bf16.mxu0 0
    %1353 = vmatpush2.bf16.msra.mxu0 %v1031
    %1354 = vmatprep.subr.bf16.mxu0 0
    %1355 = vmatpush2.bf16.msra.mxu0 %v1030
    %1356 = vmatprep.subr.bf16.mxu0 0
    %1357 = vmatpush2.bf16.msra.mxu0 %v1029
    %1358 = vmatprep.subr.bf16.mxu0 0
    %1359 = vmatpush2.bf16.msra.mxu0 %v1028
    %1360 = vmatprep.subr.bf16.mxu0 0
    %1361 = vmatpush2.bf16.msra.mxu0 %v1027
    %1362 = vmatprep.subr.bf16.mxu0 0
    %1363 = vmatpush2.bf16.msra.mxu0 %v1026
    %1364 = vmatprep.subr.bf16.mxu0 0
    %1365 = vmatpush2.bf16.msra.mxu0 %v1025
    %1366 = vmatprep.subr.bf16.mxu0 0
    %1367 = vmatpush2.bf16.msra.mxu0 %v1024
    %1368 = vmatprep.mubr.bf16.mxu0 %v1335
    %1369 = vmatmul.mubr.bf16.gmra.mxu0 %v1334
    %v1370 = vpop.f32.mrf.mxu0
    %v1371 = vadd.f32 %v820, %v1370
    %v1372 = vpop.f32.mrf.mxu0
    %v1373 = vpop.f32.mrf.mxu0
    %v1374 = vpop.f32.mrf.mxu0
    %1375 = vdwg.mxu0
    %v1376 = vmul.f32 %v1371, 0.39710897
    %v1377 = vmul.f32 %v1284, 0.60286576
    %v1378 = vadd.f32 %v1376, %v1377
    %v1379 = vld [vmem:[%s3 + $0x18] sm:$0xff]
    %v1380 = vadd.f32 %v1378, %v1379
    %1381 = vst [vmem:[%s9 + $0x18] sm:$0xff] %v1380
    %v1382 = vld [vmem:[%s2 + $0x20] sm:$0xff]
    %v1383 = vadd.f32 %v1380, %v1382
    %v1384 = vpack.c.bf16 %v1383, %v1383
    %1385 = vmatprep.subr.bf16.mxu0 %v888
    %1386 = vmatpush1.bf16.msra.mxu0 %v887
    %1387 = vmatprep.subr.bf16.mxu0 %v886
    %1388 = vmatpush1.bf16.msra.mxu0 %v885
    %1389 = vmatprep.subr.bf16.mxu0 %v884
    %1390 = vmatpush1.bf16.msra.mxu0 %v883
    %1391 = vmatprep.subr.bf16.mxu0 %v882
    %1392 = vmatpush1.bf16.msra.mxu0 %v881
    %1393 = vmatprep.subr.bf16.mxu0 %v880
    %1394 = vmatpush1.bf16.msra.mxu0 %v879
    %1395 = vmatprep.subr.bf16.mxu0 %v878
    %1396 = vmatpush1.bf16.msra.mxu0 %v877
    %1397 = vmatprep.subr.bf16.mxu0 %v876
    %1398 = vmatpush1.bf16.msra.mxu0 %v875
    %1399 = vmatprep.subr.bf16.mxu0 %v874
    %1400 = vmatpush1.bf16.msra.mxu0 %v873
    %1401 = vmatprep.subr.bf16.mxu0 0
    %1402 = vmatpush2.bf16.msra.mxu0 0
    %1403 = vmatprep.subr.bf16.mxu0 0
    %1404 = vmatpush2.bf16.msra.mxu0 0
    %1405 = vmatprep.subr.bf16.mxu0 0
    %1406 = vmatpush2.bf16.msra.mxu0 0
    %1407 = vmatprep.subr.bf16.mxu0 0
    %1408 = vmatpush2.bf16.msra.mxu0 0
    %1409 = vmatprep.subr.bf16.mxu0 0
    %1410 = vmatpush2.bf16.msra.mxu0 0
    %1411 = vmatprep.subr.bf16.mxu0 0
    %1412 = vmatpush2.bf16.msra.mxu0 0
    %1413 = vmatprep.subr.bf16.mxu0 0
    %1414 = vmatpush2.bf16.msra.mxu0 0
    %1415 = vmatprep.subr.bf16.mxu0 0
    %1416 = vmatpush2.bf16.msra.mxu0 0
    %1417 = vmatprep.mubr.bf16.mxu0 0
    %1418 = vmatmul.mubr.bf16.gmra.mxu0 %v1384
    %v1419 = vpop.f32.mrf.mxu0
    %v1420 = vadd.f32 %v764, %v1419
    %v1421 = vpop.f32.mrf.mxu0
    %v1422 = vadd.f32 %v766, %v1421
    %v1423 = vpop.f32.mrf.mxu0
    %v1424 = vpop.f32.mrf.mxu0
    %1425 = vdwg.mxu0
    %v1426 = vadd.f32 %v1420, %v818
    %v1427 = vadd.f32 %v1422, %v819
    %v1428 = vmax.f32 %v1426, 0.0
    %v1429 = vmax.f32 %v1427, 0.0
    %v1430 = vpack.c.bf16 %v1428, %v1428
    %v1431 = vpack.c.bf16 %v1429, %v1429
    %1432 = vmatprep.subr.bf16.mxu0 0
    %1433 = vmatpush1.bf16.msra.mxu0 %v1023
    %1434 = vmatprep.subr.bf16.mxu0 0
    %1435 = vmatpush1.bf16.msra.mxu0 %v1022
    %1436 = vmatprep.subr.bf16.mxu0 0
    %1437 = vmatpush1.bf16.msra.mxu0 %v1021
    %1438 = vmatprep.subr.bf16.mxu0 0
    %1439 = vmatpush1.bf16.msra.mxu0 %v1020
    %1440 = vmatprep.subr.bf16.mxu0 0
    %1441 = vmatpush1.bf16.msra.mxu0 %v1019
    %1442 = vmatprep.subr.bf16.mxu0 0
    %1443 = vmatpush1.bf16.msra.mxu0 %v1018
    %1444 = vmatprep.subr.bf16.mxu0 0
    %1445 = vmatpush1.bf16.msra.mxu0 %v1017
    %1446 = vmatprep.subr.bf16.mxu0 0
    %1447 = vmatpush1.bf16.msra.mxu0 %v1016
    %1448 = vmatprep.subr.bf16.mxu0 0
    %1449 = vmatpush2.bf16.msra.mxu0 %v1031
    %1450 = vmatprep.subr.bf16.mxu0 0
    %1451 = vmatpush2.bf16.msra.mxu0 %v1030
    %1452 = vmatprep.subr.bf16.mxu0 0
    %1453 = vmatpush2.bf16.msra.mxu0 %v1029
    %1454 = vmatprep.subr.bf16.mxu0 0
    %1455 = vmatpush2.bf16.msra.mxu0 %v1028
    %1456 = vmatprep.subr.bf16.mxu0 0
    %1457 = vmatpush2.bf16.msra.mxu0 %v1027
    %1458 = vmatprep.subr.bf16.mxu0 0
    %1459 = vmatpush2.bf16.msra.mxu0 %v1026
    %1460 = vmatprep.subr.bf16.mxu0 0
    %1461 = vmatpush2.bf16.msra.mxu0 %v1025
    %1462 = vmatprep.subr.bf16.mxu0 0
    %1463 = vmatpush2.bf16.msra.mxu0 %v1024
    %1464 = vmatprep.mubr.bf16.mxu0 %v1431
    %1465 = vmatmul.mubr.bf16.gmra.mxu0 %v1430
    %v1466 = vpop.f32.mrf.mxu0
    %v1467 = vadd.f32 %v820, %v1466
    %v1468 = vpop.f32.mrf.mxu0
    %v1469 = vpop.f32.mrf.mxu0
    %v1470 = vpop.f32.mrf.mxu0
    %1471 = vdwg.mxu0
    %v1472 = vmul.f32 %v1467, 0.49475124
    %v1473 = vmul.f32 %v1380, 0.5052392
    %v1474 = vadd.f32 %v1472, %v1473
    %v1475 = vld [vmem:[%s3 + $0x20] sm:$0xff]
    %v1476 = vadd.f32 %v1474, %v1475
    %1477 = vst [vmem:[%s9 + $0x20] sm:$0xff] %v1476
    %v1478 = vld [vmem:[%s2 + $0x28] sm:$0xff]
    %v1479 = vadd.f32 %v1476, %v1478
    %v1480 = vpack.c.bf16 %v1479, %v1479
    %1481 = vmatprep.subr.bf16.mxu0 %v888
    %1482 = vmatpush1.bf16.msra.mxu0 %v887
    %1483 = vmatprep.subr.bf16.mxu0 %v886
    %1484 = vmatpush1.bf16.msra.mxu0 %v885
    %1485 = vmatprep.subr.bf16.mxu0 %v884
    %1486 = vmatpush1.bf16.msra.mxu0 %v883
    %1487 = vmatprep.subr.bf16.mxu0 %v882
    %1488 = vmatpush1.bf16.msra.mxu0 %v881
    %1489 = vmatprep.subr.bf16.mxu0 %v880
    %1490 = vmatpush1.bf16.msra.mxu0 %v879
    %1491 = vmatprep.subr.bf16.mxu0 %v878
    %1492 = vmatpush1.bf16.msra.mxu0 %v877
    %1493 = vmatprep.subr.bf16.mxu0 %v876
    %1494 = vmatpush1.bf16.msra.mxu0 %v875
    %1495 = vmatprep.subr.bf16.mxu0 %v874
    %1496 = vmatpush1.bf16.msra.mxu0 %v873
    %1497 = vmatprep.subr.bf16.mxu0 0
    %1498 = vmatpush2.bf16.msra.mxu0 0
    %1499 = vmatprep.subr.bf16.mxu0 0
    %1500 = vmatpush2.bf16.msra.mxu0 0
    %1501 = vmatprep.subr.bf16.mxu0 0
    %1502 = vmatpush2.bf16.msra.mxu0 0
    %1503 = vmatprep.subr.bf16.mxu0 0
    %1504 = vmatpush2.bf16.msra.mxu0 0
    %1505 = vmatprep.subr.bf16.mxu0 0
    %1506 = vmatpush2.bf16.msra.mxu0 0
    %1507 = vmatprep.subr.bf16.mxu0 0
    %1508 = vmatpush2.bf16.msra.mxu0 0
    %1509 = vmatprep.subr.bf16.mxu0 0
    %1510 = vmatpush2.bf16.msra.mxu0 0
    %1511 = vmatprep.subr.bf16.mxu0 0
    %1512 = vmatpush2.bf16.msra.mxu0 0
    %1513 = vmatprep.mubr.bf16.mxu0 0
    %1514 = vmatmul.mubr.bf16.gmra.mxu0 %v1480
    %v1515 = vpop.f32.mrf.mxu0
    %v1516 = vadd.f32 %v764, %v1515
    %v1517 = vpop.f32.mrf.mxu0
    %v1518 = vadd.f32 %v766, %v1517
    %v1519 = vpop.f32.mrf.mxu0
    %v1520 = vpop.f32.mrf.mxu0
    %1521 = vdwg.mxu0
    %v1522 = vadd.f32 %v1516, %v818
    %v1523 = vadd.f32 %v1518, %v819
    %v1524 = vmax.f32 %v1522, 0.0
    %v1525 = vmax.f32 %v1523, 0.0
    %v1526 = vpack.c.bf16 %v1524, %v1524
    %v1527 = vpack.c.bf16 %v1525, %v1525
    %1528 = vmatprep.subr.bf16.mxu0 0
    %1529 = vmatpush1.bf16.msra.mxu0 %v1023
    %1530 = vmatprep.subr.bf16.mxu0 0
    %1531 = vmatpush1.bf16.msra.mxu0 %v1022
    %1532 = vmatprep.subr.bf16.mxu0 0
    %1533 = vmatpush1.bf16.msra.mxu0 %v1021
    %1534 = vmatprep.subr.bf16.mxu0 0
    %1535 = vmatpush1.bf16.msra.mxu0 %v1020
    %1536 = vmatprep.subr.bf16.mxu0 0
    %1537 = vmatpush1.bf16.msra.mxu0 %v1019
    %1538 = vmatprep.subr.bf16.mxu0 0
    %1539 = vmatpush1.bf16.msra.mxu0 %v1018
    %1540 = vmatprep.subr.bf16.mxu0 0
    %1541 = vmatpush1.bf16.msra.mxu0 %v1017
    %1542 = vmatprep.subr.bf16.mxu0 0
    %1543 = vmatpush1.bf16.msra.mxu0 %v1016
    %1544 = vmatprep.subr.bf16.mxu0 0
    %1545 = vmatpush2.bf16.msra.mxu0 %v1031
    %1546 = vmatprep.subr.bf16.mxu0 0
    %1547 = vmatpush2.bf16.msra.mxu0 %v1030
    %1548 = vmatprep.subr.bf16.mxu0 0
    %1549 = vmatpush2.bf16.msra.mxu0 %v1029
    %1550 = vmatprep.subr.bf16.mxu0 0
    %1551 = vmatpush2.bf16.msra.mxu0 %v1028
    %1552 = vmatprep.subr.bf16.mxu0 0
    %1553 = vmatpush2.bf16.msra.mxu0 %v1027
    %1554 = vmatprep.subr.bf16.mxu0 0
    %1555 = vmatpush2.bf16.msra.mxu0 %v1026
    %1556 = vmatprep.subr.bf16.mxu0 0
    %1557 = vmatpush2.bf16.msra.mxu0 %v1025
    %1558 = vmatprep.subr.bf16.mxu0 0
    %1559 = vmatpush2.bf16.msra.mxu0 %v1024
    %1560 = vmatprep.mubr.bf16.mxu0 %v1527
    %1561 = vmatmul.mubr.bf16.gmra.mxu0 %v1526
    %v1562 = vpop.f32.mrf.mxu0
    %v1563 = vadd.f32 %v820, %v1562
    %v1564 = vpop.f32.mrf.mxu0
    %v1565 = vpop.f32.mrf.mxu0
    %v1566 = vpop.f32.mrf.mxu0
    %1567 = vdwg.mxu0
    %v1568 = vmul.f32 %v1563, 0.6556713
    %v1569 = vmul.f32 %v1476, 0.3443265
    %v1570 = vadd.f32 %v1568, %v1569
    %v1571 = vld [vmem:[%s3 + $0x28] sm:$0xff]
    %v1572 = vadd.f32 %v1570, %v1571
    %1573 = vst [vmem:[%s9 + $0x28] sm:$0xff] %v1572
    %v1574 = vld [vmem:[%s2 + $0x30] sm:$0xff]
    %v1575 = vadd.f32 %v1572, %v1574
    %v1576 = vpack.c.bf16 %v1575, %v1575
    %1577 = vmatprep.subr.bf16.mxu0 %v888
    %1578 = vmatpush1.bf16.msra.mxu0 %v887
    %1579 = vmatprep.subr.bf16.mxu0 %v886
    %1580 = vmatpush1.bf16.msra.mxu0 %v885
    %1581 = vmatprep.subr.bf16.mxu0 %v884
    %1582 = vmatpush1.bf16.msra.mxu0 %v883
    %1583 = vmatprep.subr.bf16.mxu0 %v882
    %1584 = vmatpush1.bf16.msra.mxu0 %v881
    %1585 = vmatprep.subr.bf16.mxu0 %v880
    %1586 = vmatpush1.bf16.msra.mxu0 %v879
    %1587 = vmatprep.subr.bf16.mxu0 %v878
    %1588 = vmatpush1.bf16.msra.mxu0 %v877
    %1589 = vmatprep.subr.bf16.mxu0 %v876
    %1590 = vmatpush1.bf16.msra.mxu0 %v875
    %1591 = vmatprep.subr.bf16.mxu0 %v874
    %1592 = vmatpush1.bf16.msra.mxu0 %v873
    %1593 = vmatprep.subr.bf16.mxu0 0
    %1594 = vmatpush2.bf16.msra.mxu0 0
    %1595 = vmatprep.subr.bf16.mxu0 0
    %1596 = vmatpush2.bf16.msra.mxu0 0
    %1597 = vmatprep.subr.bf16.mxu0 0
    %1598 = vmatpush2.bf16.msra.mxu0 0
    %1599 = vmatprep.subr.bf16.mxu0 0
    %1600 = vmatpush2.bf16.msra.mxu0 0
    %1601 = vmatprep.subr.bf16.mxu0 0
    %1602 = vmatpush2.bf16.msra.mxu0 0
    %1603 = vmatprep.subr.bf16.mxu0 0
    %1604 = vmatpush2.bf16.msra.mxu0 0
    %1605 = vmatprep.subr.bf16.mxu0 0
    %1606 = vmatpush2.bf16.msra.mxu0 0
    %1607 = vmatprep.subr.bf16.mxu0 0
    %1608 = vmatpush2.bf16.msra.mxu0 0
    %1609 = vmatprep.mubr.bf16.mxu0 0
    %1610 = vmatmul.mubr.bf16.gmra.mxu0 %v1576
    %v1611 = vpop.f32.mrf.mxu0
    %v1612 = vadd.f32 %v764, %v1611
    %v1613 = vpop.f32.mrf.mxu0
    %v1614 = vadd.f32 %v766, %v1613
    %v1615 = vpop.f32.mrf.mxu0
    %v1616 = vpop.f32.mrf.mxu0
    %1617 = vdwg.mxu0
    %v1618 = vadd.f32 %v1612, %v818
    %v1619 = vadd.f32 %v1614, %v819
    %v1620 = vmax.f32 %v1618, 0.0
    %v1621 = vmax.f32 %v1619, 0.0
    %v1622 = vpack.c.bf16 %v1620, %v1620
    %v1623 = vpack.c.bf16 %v1621, %v1621
    %1624 = vmatprep.subr.bf16.mxu0 0
    %1625 = vmatpush1.bf16.msra.mxu0 %v1023
    %1626 = vmatprep.subr.bf16.mxu0 0
    %1627 = vmatpush1.bf16.msra.mxu0 %v1022
    %1628 = vmatprep.subr.bf16.mxu0 0
    %1629 = vmatpush1.bf16.msra.mxu0 %v1021
    %1630 = vmatprep.subr.bf16.mxu0 0
    %1631 = vmatpush1.bf16.msra.mxu0 %v1020
    %1632 = vmatprep.subr.bf16.mxu0 0
    %1633 = vmatpush1.bf16.msra.mxu0 %v1019
    %1634 = vmatprep.subr.bf16.mxu0 0
    %1635 = vmatpush1.bf16.msra.mxu0 %v1018
    %1636 = vmatprep.subr.bf16.mxu0 0
    %1637 = vmatpush1.bf16.msra.mxu0 %v1017
    %1638 = vmatprep.subr.bf16.mxu0 0
    %1639 = vmatpush1.bf16.msra.mxu0 %v1016
    %1640 = vmatprep.subr.bf16.mxu0 0
    %1641 = vmatpush2.bf16.msra.mxu0 %v1031
    %1642 = vmatprep.subr.bf16.mxu0 0
    %1643 = vmatpush2.bf16.msra.mxu0 %v1030
    %1644 = vmatprep.subr.bf16.mxu0 0
    %1645 = vmatpush2.bf16.msra.mxu0 %v1029
    %1646 = vmatprep.subr.bf16.mxu0 0
    %1647 = vmatpush2.bf16.msra.mxu0 %v1028
    %1648 = vmatprep.subr.bf16.mxu0 0
    %1649 = vmatpush2.bf16.msra.mxu0 %v1027
    %1650 = vmatprep.subr.bf16.mxu0 0
    %1651 = vmatpush2.bf16.msra.mxu0 %v1026
    %1652 = vmatprep.subr.bf16.mxu0 0
    %1653 = vmatpush2.bf16.msra.mxu0 %v1025
    %1654 = vmatprep.subr.bf16.mxu0 0
    %1655 = vmatpush2.bf16.msra.mxu0 %v1024
    %1656 = vmatprep.mubr.bf16.mxu0 %v1623
    %1657 = vmatmul.mubr.bf16.gmra.mxu0 %v1622
    %v1658 = vpop.f32.mrf.mxu0
    %v1659 = vadd.f32 %v820, %v1658
    %v1660 = vpop.f32.mrf.mxu0
    %v1661 = vpop.f32.mrf.mxu0
    %v1662 = vpop.f32.mrf.mxu0
    %1663 = vdwg.mxu0
    %v1664 = vmul.f32 %v1659, 0.9671813
    %v1665 = vmul.f32 %v1572, 0.03281863
    %v1666 = vadd.f32 %v1664, %v1665
    %v1667 = vld [vmem:[%s3 + $0x30] sm:$0xff]
    %v1668 = vadd.f32 %v1666, %v1667
    %1669 = vst [vmem:[%s9 + $0x30] sm:$0xff] %v1668
    %v1670 = vld [vmem:[%s2 + $0x38] sm:$0xff]
    %v1671 = vadd.f32 %v1668, %v1670
    %v1672 = vpack.c.bf16 %v1671, %v1671
    %1673 = vmatprep.subr.bf16.mxu0 %v888
    %1674 = vmatpush1.bf16.msra.mxu0 %v887
    %1675 = vmatprep.subr.bf16.mxu0 %v886
    %1676 = vmatpush1.bf16.msra.mxu0 %v885
    %1677 = vmatprep.subr.bf16.mxu0 %v884
    %1678 = vmatpush1.bf16.msra.mxu0 %v883
    %1679 = vmatprep.subr.bf16.mxu0 %v882
    %1680 = vmatpush1.bf16.msra.mxu0 %v881
    %1681 = vmatprep.subr.bf16.mxu0 %v880
    %1682 = vmatpush1.bf16.msra.mxu0 %v879
    %1683 = vmatprep.subr.bf16.mxu0 %v878
    %1684 = vmatpush1.bf16.msra.mxu0 %v877
    %1685 = vmatprep.subr.bf16.mxu0 %v876
    %1686 = vmatpush1.bf16.msra.mxu0 %v875
    %1687 = vmatprep.subr.bf16.mxu0 %v874
    %1688 = vmatpush1.bf16.msra.mxu0 %v873
    %1689 = vmatprep.subr.bf16.mxu0 0
    %1690 = vmatpush2.bf16.msra.mxu0 0
    %1691 = vmatprep.subr.bf16.mxu0 0
    %1692 = vmatpush2.bf16.msra.mxu0 0
    %1693 = vmatprep.subr.bf16.mxu0 0
    %1694 = vmatpush2.bf16.msra.mxu0 0
    %1695 = vmatprep.subr.bf16.mxu0 0
    %1696 = vmatpush2.bf16.msra.mxu0 0
    %1697 = vmatprep.subr.bf16.mxu0 0
    %1698 = vmatpush2.bf16.msra.mxu0 0
    %1699 = vmatprep.subr.bf16.mxu0 0
    %1700 = vmatpush2.bf16.msra.mxu0 0
    %1701 = vmatprep.subr.bf16.mxu0 0
    %1702 = vmatpush2.bf16.msra.mxu0 0
    %1703 = vmatprep.subr.bf16.mxu0 0
    %1704 = vmatpush2.bf16.msra.mxu0 0
    %1705 = vmatprep.mubr.bf16.mxu0 0
    %1706 = vmatmul.mubr.bf16.gmra.mxu0 %v1672
    %v1707 = vpop.f32.mrf.mxu0
    %v1708 = vadd.f32 %v764, %v1707
    %v1709 = vpop.f32.mrf.mxu0
    %v1710 = vadd.f32 %v766, %v1709
    %v1711 = vpop.f32.mrf.mxu0
    %v1712 = vpop.f32.mrf.mxu0
    %1713 = vdwg.mxu0
    %v1714 = vadd.f32 %v1708, %v818
    %v1715 = vadd.f32 %v1710, %v819
    %v1716 = vmax.f32 %v1714, 0.0
    %v1717 = vmax.f32 %v1715, 0.0
    %v1718 = vpack.c.bf16 %v1716, %v1716
    %v1719 = vpack.c.bf16 %v1717, %v1717
    %1720 = vmatprep.subr.bf16.mxu0 0
    %1721 = vmatpush1.bf16.msra.mxu0 %v1023
    %1722 = vmatprep.subr.bf16.mxu0 0
    %1723 = vmatpush1.bf16.msra.mxu0 %v1022
    %1724 = vmatprep.subr.bf16.mxu0 0
    %1725 = vmatpush1.bf16.msra.mxu0 %v1021
    %1726 = vmatprep.subr.bf16.mxu0 0
    %1727 = vmatpush1.bf16.msra.mxu0 %v1020
    %1728 = vmatprep.subr.bf16.mxu0 0
    %1729 = vmatpush1.bf16.msra.mxu0 %v1019
    %1730 = vmatprep.subr.bf16.mxu0 0
    %1731 = vmatpush1.bf16.msra.mxu0 %v1018
    %1732 = vmatprep.subr.bf16.mxu0 0
    %1733 = vmatpush1.bf16.msra.mxu0 %v1017
    %1734 = vmatprep.subr.bf16.mxu0 0
    %1735 = vmatpush1.bf16.msra.mxu0 %v1016
    %1736 = vmatprep.subr.bf16.mxu0 0
    %1737 = vmatpush2.bf16.msra.mxu0 %v1031
    %1738 = vmatprep.subr.bf16.mxu0 0
    %1739 = vmatpush2.bf16.msra.mxu0 %v1030
    %1740 = vmatprep.subr.bf16.mxu0 0
    %1741 = vmatpush2.bf16.msra.mxu0 %v1029
    %1742 = vmatprep.subr.bf16.mxu0 0
    %1743 = vmatpush2.bf16.msra.mxu0 %v1028
    %1744 = vmatprep.subr.bf16.mxu0 0
    %1745 = vmatpush2.bf16.msra.mxu0 %v1027
    %1746 = vmatprep.subr.bf16.mxu0 0
    %1747 = vmatpush2.bf16.msra.mxu0 %v1026
    %1748 = vmatprep.subr.bf16.mxu0 0
    %1749 = vmatpush2.bf16.msra.mxu0 %v1025
    %1750 = vmatprep.subr.bf16.mxu0 0
    %1751 = vmatpush2.bf16.msra.mxu0 %v1024
    %1752 = vmatprep.mubr.bf16.mxu0 %v1719
    %1753 = vmatmul.mubr.bf16.gmra.mxu0 %v1718
    %v1754 = vpop.f32.mrf.mxu0
    %v1755 = vadd.f32 %v820, %v1754
    %v1756 = vpop.f32.mrf.mxu0
    %v1757 = vpop.f32.mrf.mxu0
    %v1758 = vpop.f32.mrf.mxu0
    %1759 = vdwg.mxu0
    %v1760 = vmul.f32 %v1668, 0.0
    %v1761 = vadd.f32 %v1755, %v1760
    %v1762 = vld [vmem:[%s3 + $0x38] sm:$0xff]
    %v1763 = vadd.f32 %v1761, %v1762
    %1764 = vst [vmem:[%s9 + $0x38] sm:$0xff] %v1763
    // Predicated region
    $region46: #{gaussian_diffusion_sample.3} parent=1 // pred_check
      _
    $region47: #{gaussian_diffusion_sample.3} parent=1 // pred_check_branch
      %1766 = sbr.rel (0) target = $region49
    $region48: #{gaussian_diffusion_sample.3} parent=1 // pred_region
      _
    $region49: #{gaussian_diffusion_sample.3} parent=1 // pred_fallthru
      _
    // Predicated region
    $region50: #{gaussian_diffusion_sample.3} parent=1 // pred_check
      _
    $region51: #{gaussian_diffusion_sample.3} parent=1 // pred_check_branch
      %1768 = sbr.rel (0) target = $region53
    $region52: #{gaussian_diffusion_sample.3} parent=1 // pred_region
      _
    $region53: #{gaussian_diffusion_sample.3} parent=1 // pred_fallthru
      _
    %1769 = vsyncpa [#allocation3], 1
    %1770 = vsyncpa [#allocation5], 1

</llo_original>
